<compile_context>
chip_gen: v7x
topology: tpu7x:2x2x1
jax: 0.10.0
libtpu: 0.0.40
codegen_flags: <defaults>
</compile_context>

<pallas_src>
import jax
import jax.numpy as jnp
from jax.experimental import pallas as pl
from jax.experimental.pallas import tpu as pltpu


def _mlp_kernel(x_ref, w1_ref, b1_ref, w2_ref, b2_ref, o_ref):
    """out_t = relu(W2 @ relu(W1^T x_t + b1) + b2), batch on the lane axis.

    x_ref : (in_num , B)      VMEM  -- lane-dense batch axis
    w1_ref: (in_num , hidden) SMEM  -- input_layer.weight.T  (long axis last)
    b1_ref: (hidden,)         SMEM
    w2_ref: (out_num, hidden) SMEM  -- output_layer.weight (torch-native layout)
    b2_ref: (out_num,)        SMEM
    o_ref : (out_num, B)      VMEM  -- lane-dense, unmasked stores when B%128==0
    """
    in_num = x_ref.shape[0]
    hidden = w1_ref.shape[1]
    out_num = o_ref.shape[0]

    # Load the few lane-dense input rows once.  Explicit f32 so the unrolled
    # VPU path always accumulates in f32 (matters if inputs ever become bf16).
    x_rows = [x_ref[k:k + 1, :].astype(jnp.float32) for k in range(in_num)]

    # Fully fused layers, pure VALU work (no MXU, no XLU):
    # for each hidden unit h, build its layer-1 activation row with
    # scalar-from-SMEM x lane-dense-vector FMAs, then immediately fold it into
    # the out_num layer-2 accumulators, so h1 never materializes and only
    # ~(in_num + out_num + 1) (1, B) slabs are live at any time.
    acc = [None] * out_num
    for h in range(hidden):
        row = w1_ref[0, h] * x_rows[0]
        for k in range(1, in_num):
            row = row + w1_ref[k, h] * x_rows[k]
        row = jnp.maximum(row + b1_ref[h], 0.0)            # ReLU(layer 1)
        for o in range(out_num):
            term = w2_ref[o, h] * row
            acc[o] = term if acc[o] is None else acc[o] + term

    for o in range(out_num):                               # ReLU(layer 2)
        o_ref[o:o + 1, :] = jnp.maximum(acc[o] + b2_ref[o], 0.0).astype(o_ref.dtype)


def _cost(b, in_num, hidden, out_num):
    flops = 2 * b * hidden * (in_num + out_num) + b * (2 * hidden + 2 * out_num)
    bytes_accessed = 4 * (b * in_num + b * out_num
                          + in_num * hidden + hidden + out_num * hidden + out_num)
    return pl.CostEstimate(flops=flops, transcendentals=0,
                           bytes_accessed=bytes_accessed)


def _mlp_single_block(x_t, w1, b1, w2, b2):
    """Whole problem as one VMEM-resident block: no grid, no pipeline bookkeeping."""
    in_num, B = x_t.shape
    hidden = w1.shape[1]
    out_num = w2.shape[0]
    vmem = pl.BlockSpec(memory_space=pltpu.MemorySpace.VMEM)
    smem = pl.BlockSpec(memory_space=pltpu.MemorySpace.SMEM)
    return pl.pallas_call(
        _mlp_kernel,
        out_shape=jax.ShapeDtypeStruct((out_num, B), jnp.float32),
        in_specs=[vmem, smem, smem, smem, smem],
        out_specs=vmem,
        cost_estimate=_cost(B, in_num, hidden, out_num),
    )(x_t, w1, b1, w2, b2)


def _mlp_batched(x_t, w1, b1, w2, b2, *, tb):
    """Large-batch path: tile the lane-dense batch axis; params stay SMEM-resident."""
    in_num, Bp = x_t.shape
    hidden = w1.shape[1]
    out_num = w2.shape[0]
    n_tiles = Bp // tb
    smem = pl.BlockSpec(memory_space=pltpu.MemorySpace.SMEM)
    return pl.pallas_call(
        _mlp_kernel,
        out_shape=jax.ShapeDtypeStruct((out_num, Bp), jnp.float32),
        grid=(n_tiles,),
        in_specs=[
            pl.BlockSpec((in_num, tb), lambda i: (0, i)),   # lane-dense batch tile
            smem, smem, smem, smem,                         # params resident in SMEM
        ],
        out_specs=pl.BlockSpec((out_num, tb), lambda i: (0, i)),
        compiler_params=pltpu.CompilerParams(
            dimension_semantics=("parallel",)),             # shards tiles on v7x's 2 TCs
        cost_estimate=_cost(Bp, in_num, hidden, out_num),
    )(x_t, w1, b1, w2, b2)


def mlp_forward(x, w1, b1, w2, b2, *, batch_tile=2048):
    """Forward of `network`: relu(output_layer(relu(input_layer(x)))).

    x : (B, in_num) f32
    w1: (in_num, hidden)  == input_layer.weight.T
    b1: (hidden,)         == input_layer.bias
    w2: (out_num, hidden) == output_layer.weight (torch-native (out, in))
    b2: (out_num,)        == output_layer.bias
    Returns (B, out_num) f32.
    """
    B = x.shape[0]
    if B <= batch_tile:
        # Single VMEM block: the wrapper transpose is pure layout plumbing so
        # the kernel sees batch on the lane (last) axis.
        return _mlp_single_block(x.T, w1, b1, w2, b2).T
    # Grid path.  Pad batch to a tile multiple; XLA fuses the pad into the
    # transpose pass that is needed anyway (no separate HBM round-trip).
    # TODO(synk): on v7x, rounding the tile count up to an even number would
    # keep both TensorCores busy when it happens to be odd.
    padded = pl.cdiv(B, batch_tile) * batch_tile
    if padded != B:
        x = jnp.pad(x, ((0, padded - B), (0, 0)))
    out_t = _mlp_batched(x.T, w1, b1, w2, b2, tb=batch_tile)
    return out_t[:, :B].T


def init_linear_params(key, in_features, out_features):
    """torch.nn.Linear-style init (uniform +-1/sqrt(fan_in)).
    Returns weight in torch-native (out_features, in_features) layout and bias (out_features,)."""
    kw, kb = jax.random.split(key)
    bound = 1.0 / jnp.sqrt(jnp.float32(in_features))
    w = jax.random.uniform(kw, (out_features, in_features), jnp.float32,
                           minval=-bound, maxval=bound)
    b = jax.random.uniform(kb, (out_features,), jnp.float32,
                           minval=-bound, maxval=bound)
    return w, b


if __name__ == "__main__":
    # XOR-style problem: in_num=2, hidden_num=32, out_num=2
    in_num, hidden_num, out_num = 2, 32, 2

    key = jax.random.PRNGKey(0)
    kx_small, kx_big, k1, k2 = jax.random.split(key, 4)

    w1_torch, b1 = init_linear_params(k1, in_num, hidden_num)   # input_layer  (hidden, in)
    w2, b2 = init_linear_params(k2, hidden_num, out_num)        # output_layer (out, hidden)
    w1 = w1_torch.T                                             # kernel wants (in, hidden)

    def reference(x):
        h1 = jnp.maximum(x @ w1 + b1[None, :], 0.0)
        h2 = jnp.maximum(h1 @ w2.T + b2[None, :], 0.0)
        return h2

    # 1) Tiny batch -> single VMEM block, no grid (the original workload size).
    x_small = jax.random.uniform(kx_small, (8, in_num), jnp.float32)
    out_small = jax.block_until_ready(mlp_forward(x_small, w1, b1, w2, b2))
    assert out_small.shape == (8, out_num)
    assert jnp.allclose(out_small, reference(x_small), atol=1e-5, rtol=1e-5)

    # 2) Larger ragged batch -> lane-tiled parallel-grid path (+ pad/slice-back).
    x_big = jax.random.uniform(kx_big, (4100, in_num), jnp.float32)
    out_big = jax.block_until_ready(mlp_forward(x_big, w1, b1, w2, b2))
    assert out_big.shape == (4100, out_num)
    assert jnp.allclose(out_big, reference(x_big), atol=1e-5, rtol=1e-5)

    print("KERNEL_OK")
</pallas_src>

<mosaic_0001>
module attributes {stable_mosaic.version = 11 : i64} {
  func.func @_mlp_kernel(%arg0: memref<2x8xf32, #tpu.memory_space<vmem>>, %arg1: memref<2x32xf32, #tpu.memory_space<smem>>, %arg2: memref<32xf32, #tpu.memory_space<smem>>, %arg3: memref<2x32xf32, #tpu.memory_space<smem>>, %arg4: memref<2xf32, #tpu.memory_space<smem>>, %arg5: memref<2x8xf32, #tpu.memory_space<vmem>>) attributes {dimension_semantics = [], scalar_prefetch = 0 : i64, scratch_operands = 0 : i64, tpu.core_type = #tpu.core_type<tc>} {
    %c0 = arith.constant 0 : index
    %c0_0 = arith.constant 0 : index
    %0 = vector.load %arg0[%c0, %c0_0] : memref<2x8xf32, #tpu.memory_space<vmem>>, vector<1x8xf32>
    %c1 = arith.constant 1 : index
    %c0_1 = arith.constant 0 : index
    %1 = vector.load %arg0[%c1, %c0_1] : memref<2x8xf32, #tpu.memory_space<vmem>>, vector<1x8xf32>
    %c0_2 = arith.constant 0 : index
    %c0_3 = arith.constant 0 : index
    %2 = memref.load %arg1[%c0_2, %c0_3] : memref<2x32xf32, #tpu.memory_space<smem>>
    %3 = vector.broadcast %2 : f32 to vector<1x8xf32>
    %4 = arith.mulf %3, %0 : vector<1x8xf32>
    %c1_4 = arith.constant 1 : index
    %c0_5 = arith.constant 0 : index
    %5 = memref.load %arg1[%c1_4, %c0_5] : memref<2x32xf32, #tpu.memory_space<smem>>
    %6 = vector.broadcast %5 : f32 to vector<1x8xf32>
    %7 = arith.mulf %6, %1 : vector<1x8xf32>
    %8 = arith.addf %4, %7 : vector<1x8xf32>
    %c0_6 = arith.constant 0 : index
    %9 = memref.load %arg2[%c0_6] : memref<32xf32, #tpu.memory_space<smem>>
    %10 = vector.broadcast %9 : f32 to vector<1x8xf32>
    %11 = arith.addf %8, %10 : vector<1x8xf32>
    %cst = arith.constant 0.000000e+00 : f32
    %12 = vector.broadcast %cst : f32 to vector<1x8xf32>
    %13 = arith.maximumf %11, %12 : vector<1x8xf32>
    %c0_7 = arith.constant 0 : index
    %c0_8 = arith.constant 0 : index
    %14 = memref.load %arg3[%c0_7, %c0_8] : memref<2x32xf32, #tpu.memory_space<smem>>
    %15 = vector.broadcast %14 : f32 to vector<1x8xf32>
    %16 = arith.mulf %15, %13 : vector<1x8xf32>
    %c1_9 = arith.constant 1 : index
    %c0_10 = arith.constant 0 : index
    %17 = memref.load %arg3[%c1_9, %c0_10] : memref<2x32xf32, #tpu.memory_space<smem>>
    %18 = vector.broadcast %17 : f32 to vector<1x8xf32>
    %19 = arith.mulf %18, %13 : vector<1x8xf32>
    %c0_11 = arith.constant 0 : index
    %c1_12 = arith.constant 1 : index
    %20 = memref.load %arg1[%c0_11, %c1_12] : memref<2x32xf32, #tpu.memory_space<smem>>
    %21 = vector.broadcast %20 : f32 to vector<1x8xf32>
    %22 = arith.mulf %21, %0 : vector<1x8xf32>
    %c1_13 = arith.constant 1 : index
    %c1_14 = arith.constant 1 : index
    %23 = memref.load %arg1[%c1_13, %c1_14] : memref<2x32xf32, #tpu.memory_space<smem>>
    %24 = vector.broadcast %23 : f32 to vector<1x8xf32>
    %25 = arith.mulf %24, %1 : vector<1x8xf32>
    %26 = arith.addf %22, %25 : vector<1x8xf32>
    %c1_15 = arith.constant 1 : index
    %27 = memref.load %arg2[%c1_15] : memref<32xf32, #tpu.memory_space<smem>>
    %28 = vector.broadcast %27 : f32 to vector<1x8xf32>
    %29 = arith.addf %26, %28 : vector<1x8xf32>
    %cst_16 = arith.constant 0.000000e+00 : f32
    %30 = vector.broadcast %cst_16 : f32 to vector<1x8xf32>
    %31 = arith.maximumf %29, %30 : vector<1x8xf32>
    %c0_17 = arith.constant 0 : index
    %c1_18 = arith.constant 1 : index
    %32 = memref.load %arg3[%c0_17, %c1_18] : memref<2x32xf32, #tpu.memory_space<smem>>
    %33 = vector.broadcast %32 : f32 to vector<1x8xf32>
    %34 = arith.mulf %33, %31 : vector<1x8xf32>
    %35 = arith.addf %16, %34 : vector<1x8xf32>
    %c1_19 = arith.constant 1 : index
    %c1_20 = arith.constant 1 : index
    %36 = memref.load %arg3[%c1_19, %c1_20] : memref<2x32xf32, #tpu.memory_space<smem>>
    %37 = vector.broadcast %36 : f32 to vector<1x8xf32>
    %38 = arith.mulf %37, %31 : vector<1x8xf32>
    %39 = arith.addf %19, %38 : vector<1x8xf32>
    %c0_21 = arith.constant 0 : index
    %c2 = arith.constant 2 : index
    %40 = memref.load %arg1[%c0_21, %c2] : memref<2x32xf32, #tpu.memory_space<smem>>
    %41 = vector.broadcast %40 : f32 to vector<1x8xf32>
    %42 = arith.mulf %41, %0 : vector<1x8xf32>
    %c1_22 = arith.constant 1 : index
    %c2_23 = arith.constant 2 : index
    %43 = memref.load %arg1[%c1_22, %c2_23] : memref<2x32xf32, #tpu.memory_space<smem>>
    %44 = vector.broadcast %43 : f32 to vector<1x8xf32>
    %45 = arith.mulf %44, %1 : vector<1x8xf32>
    %46 = arith.addf %42, %45 : vector<1x8xf32>
    %c2_24 = arith.constant 2 : index
    %47 = memref.load %arg2[%c2_24] : memref<32xf32, #tpu.memory_space<smem>>
    %48 = vector.broadcast %47 : f32 to vector<1x8xf32>
    %49 = arith.addf %46, %48 : vector<1x8xf32>
    %cst_25 = arith.constant 0.000000e+00 : f32
    %50 = vector.broadcast %cst_25 : f32 to vector<1x8xf32>
    %51 = arith.maximumf %49, %50 : vector<1x8xf32>
    %c0_26 = arith.constant 0 : index
    %c2_27 = arith.constant 2 : index
    %52 = memref.load %arg3[%c0_26, %c2_27] : memref<2x32xf32, #tpu.memory_space<smem>>
    %53 = vector.broadcast %52 : f32 to vector<1x8xf32>
    %54 = arith.mulf %53, %51 : vector<1x8xf32>
    %55 = arith.addf %35, %54 : vector<1x8xf32>
    %c1_28 = arith.constant 1 : index
    %c2_29 = arith.constant 2 : index
    %56 = memref.load %arg3[%c1_28, %c2_29] : memref<2x32xf32, #tpu.memory_space<smem>>
    %57 = vector.broadcast %56 : f32 to vector<1x8xf32>
    %58 = arith.mulf %57, %51 : vector<1x8xf32>
    %59 = arith.addf %39, %58 : vector<1x8xf32>
    %c0_30 = arith.constant 0 : index
    %c3 = arith.constant 3 : index
    %60 = memref.load %arg1[%c0_30, %c3] : memref<2x32xf32, #tpu.memory_space<smem>>
    %61 = vector.broadcast %60 : f32 to vector<1x8xf32>
    %62 = arith.mulf %61, %0 : vector<1x8xf32>
    %c1_31 = arith.constant 1 : index
    %c3_32 = arith.constant 3 : index
    %63 = memref.load %arg1[%c1_31, %c3_32] : memref<2x32xf32, #tpu.memory_space<smem>>
    %64 = vector.broadcast %63 : f32 to vector<1x8xf32>
    %65 = arith.mulf %64, %1 : vector<1x8xf32>
    %66 = arith.addf %62, %65 : vector<1x8xf32>
    %c3_33 = arith.constant 3 : index
    %67 = memref.load %arg2[%c3_33] : memref<32xf32, #tpu.memory_space<smem>>
    %68 = vector.broadcast %67 : f32 to vector<1x8xf32>
    %69 = arith.addf %66, %68 : vector<1x8xf32>
    %cst_34 = arith.constant 0.000000e+00 : f32
    %70 = vector.broadcast %cst_34 : f32 to vector<1x8xf32>
    %71 = arith.maximumf %69, %70 : vector<1x8xf32>
    %c0_35 = arith.constant 0 : index
    %c3_36 = arith.constant 3 : index
    %72 = memref.load %arg3[%c0_35, %c3_36] : memref<2x32xf32, #tpu.memory_space<smem>>
    %73 = vector.broadcast %72 : f32 to vector<1x8xf32>
    %74 = arith.mulf %73, %71 : vector<1x8xf32>
    %75 = arith.addf %55, %74 : vector<1x8xf32>
    %c1_37 = arith.constant 1 : index
    %c3_38 = arith.constant 3 : index
    %76 = memref.load %arg3[%c1_37, %c3_38] : memref<2x32xf32, #tpu.memory_space<smem>>
    %77 = vector.broadcast %76 : f32 to vector<1x8xf32>
    %78 = arith.mulf %77, %71 : vector<1x8xf32>
    %79 = arith.addf %59, %78 : vector<1x8xf32>
    %c0_39 = arith.constant 0 : index
    %c4 = arith.constant 4 : index
    %80 = memref.load %arg1[%c0_39, %c4] : memref<2x32xf32, #tpu.memory_space<smem>>
    %81 = vector.broadcast %80 : f32 to vector<1x8xf32>
    %82 = arith.mulf %81, %0 : vector<1x8xf32>
    %c1_40 = arith.constant 1 : index
    %c4_41 = arith.constant 4 : index
    %83 = memref.load %arg1[%c1_40, %c4_41] : memref<2x32xf32, #tpu.memory_space<smem>>
    %84 = vector.broadcast %83 : f32 to vector<1x8xf32>
    %85 = arith.mulf %84, %1 : vector<1x8xf32>
    %86 = arith.addf %82, %85 : vector<1x8xf32>
    %c4_42 = arith.constant 4 : index
    %87 = memref.load %arg2[%c4_42] : memref<32xf32, #tpu.memory_space<smem>>
    %88 = vector.broadcast %87 : f32 to vector<1x8xf32>
    %89 = arith.addf %86, %88 : vector<1x8xf32>
    %cst_43 = arith.constant 0.000000e+00 : f32
    %90 = vector.broadcast %cst_43 : f32 to vector<1x8xf32>
    %91 = arith.maximumf %89, %90 : vector<1x8xf32>
    %c0_44 = arith.constant 0 : index
    %c4_45 = arith.constant 4 : index
    %92 = memref.load %arg3[%c0_44, %c4_45] : memref<2x32xf32, #tpu.memory_space<smem>>
    %93 = vector.broadcast %92 : f32 to vector<1x8xf32>
    %94 = arith.mulf %93, %91 : vector<1x8xf32>
    %95 = arith.addf %75, %94 : vector<1x8xf32>
    %c1_46 = arith.constant 1 : index
    %c4_47 = arith.constant 4 : index
    %96 = memref.load %arg3[%c1_46, %c4_47] : memref<2x32xf32, #tpu.memory_space<smem>>
    %97 = vector.broadcast %96 : f32 to vector<1x8xf32>
    %98 = arith.mulf %97, %91 : vector<1x8xf32>
    %99 = arith.addf %79, %98 : vector<1x8xf32>
    %c0_48 = arith.constant 0 : index
    %c5 = arith.constant 5 : index
    %100 = memref.load %arg1[%c0_48, %c5] : memref<2x32xf32, #tpu.memory_space<smem>>
    %101 = vector.broadcast %100 : f32 to vector<1x8xf32>
    %102 = arith.mulf %101, %0 : vector<1x8xf32>
    %c1_49 = arith.constant 1 : index
    %c5_50 = arith.constant 5 : index
    %103 = memref.load %arg1[%c1_49, %c5_50] : memref<2x32xf32, #tpu.memory_space<smem>>
    %104 = vector.broadcast %103 : f32 to vector<1x8xf32>
    %105 = arith.mulf %104, %1 : vector<1x8xf32>
    %106 = arith.addf %102, %105 : vector<1x8xf32>
    %c5_51 = arith.constant 5 : index
    %107 = memref.load %arg2[%c5_51] : memref<32xf32, #tpu.memory_space<smem>>
    %108 = vector.broadcast %107 : f32 to vector<1x8xf32>
    %109 = arith.addf %106, %108 : vector<1x8xf32>
    %cst_52 = arith.constant 0.000000e+00 : f32
    %110 = vector.broadcast %cst_52 : f32 to vector<1x8xf32>
    %111 = arith.maximumf %109, %110 : vector<1x8xf32>
    %c0_53 = arith.constant 0 : index
    %c5_54 = arith.constant 5 : index
    %112 = memref.load %arg3[%c0_53, %c5_54] : memref<2x32xf32, #tpu.memory_space<smem>>
    %113 = vector.broadcast %112 : f32 to vector<1x8xf32>
    %114 = arith.mulf %113, %111 : vector<1x8xf32>
    %115 = arith.addf %95, %114 : vector<1x8xf32>
    %c1_55 = arith.constant 1 : index
    %c5_56 = arith.constant 5 : index
    %116 = memref.load %arg3[%c1_55, %c5_56] : memref<2x32xf32, #tpu.memory_space<smem>>
    %117 = vector.broadcast %116 : f32 to vector<1x8xf32>
    %118 = arith.mulf %117, %111 : vector<1x8xf32>
    %119 = arith.addf %99, %118 : vector<1x8xf32>
    %c0_57 = arith.constant 0 : index
    %c6 = arith.constant 6 : index
    %120 = memref.load %arg1[%c0_57, %c6] : memref<2x32xf32, #tpu.memory_space<smem>>
    %121 = vector.broadcast %120 : f32 to vector<1x8xf32>
    %122 = arith.mulf %121, %0 : vector<1x8xf32>
    %c1_58 = arith.constant 1 : index
    %c6_59 = arith.constant 6 : index
    %123 = memref.load %arg1[%c1_58, %c6_59] : memref<2x32xf32, #tpu.memory_space<smem>>
    %124 = vector.broadcast %123 : f32 to vector<1x8xf32>
    %125 = arith.mulf %124, %1 : vector<1x8xf32>
    %126 = arith.addf %122, %125 : vector<1x8xf32>
    %c6_60 = arith.constant 6 : index
    %127 = memref.load %arg2[%c6_60] : memref<32xf32, #tpu.memory_space<smem>>
    %128 = vector.broadcast %127 : f32 to vector<1x8xf32>
    %129 = arith.addf %126, %128 : vector<1x8xf32>
    %cst_61 = arith.constant 0.000000e+00 : f32
    %130 = vector.broadcast %cst_61 : f32 to vector<1x8xf32>
    %131 = arith.maximumf %129, %130 : vector<1x8xf32>
    %c0_62 = arith.constant 0 : index
    %c6_63 = arith.constant 6 : index
    %132 = memref.load %arg3[%c0_62, %c6_63] : memref<2x32xf32, #tpu.memory_space<smem>>
    %133 = vector.broadcast %132 : f32 to vector<1x8xf32>
    %134 = arith.mulf %133, %131 : vector<1x8xf32>
    %135 = arith.addf %115, %134 : vector<1x8xf32>
    %c1_64 = arith.constant 1 : index
    %c6_65 = arith.constant 6 : index
    %136 = memref.load %arg3[%c1_64, %c6_65] : memref<2x32xf32, #tpu.memory_space<smem>>
    %137 = vector.broadcast %136 : f32 to vector<1x8xf32>
    %138 = arith.mulf %137, %131 : vector<1x8xf32>
    %139 = arith.addf %119, %138 : vector<1x8xf32>
    %c0_66 = arith.constant 0 : index
    %c7 = arith.constant 7 : index
    %140 = memref.load %arg1[%c0_66, %c7] : memref<2x32xf32, #tpu.memory_space<smem>>
    %141 = vector.broadcast %140 : f32 to vector<1x8xf32>
    %142 = arith.mulf %141, %0 : vector<1x8xf32>
    %c1_67 = arith.constant 1 : index
    %c7_68 = arith.constant 7 : index
    %143 = memref.load %arg1[%c1_67, %c7_68] : memref<2x32xf32, #tpu.memory_space<smem>>
    %144 = vector.broadcast %143 : f32 to vector<1x8xf32>
    %145 = arith.mulf %144, %1 : vector<1x8xf32>
    %146 = arith.addf %142, %145 : vector<1x8xf32>
    %c7_69 = arith.constant 7 : index
    %147 = memref.load %arg2[%c7_69] : memref<32xf32, #tpu.memory_space<smem>>
    %148 = vector.broadcast %147 : f32 to vector<1x8xf32>
    %149 = arith.addf %146, %148 : vector<1x8xf32>
    %cst_70 = arith.constant 0.000000e+00 : f32
    %150 = vector.broadcast %cst_70 : f32 to vector<1x8xf32>
    %151 = arith.maximumf %149, %150 : vector<1x8xf32>
    %c0_71 = arith.constant 0 : index
    %c7_72 = arith.constant 7 : index
    %152 = memref.load %arg3[%c0_71, %c7_72] : memref<2x32xf32, #tpu.memory_space<smem>>
    %153 = vector.broadcast %152 : f32 to vector<1x8xf32>
    %154 = arith.mulf %153, %151 : vector<1x8xf32>
    %155 = arith.addf %135, %154 : vector<1x8xf32>
    %c1_73 = arith.constant 1 : index
    %c7_74 = arith.constant 7 : index
    %156 = memref.load %arg3[%c1_73, %c7_74] : memref<2x32xf32, #tpu.memory_space<smem>>
    %157 = vector.broadcast %156 : f32 to vector<1x8xf32>
    %158 = arith.mulf %157, %151 : vector<1x8xf32>
    %159 = arith.addf %139, %158 : vector<1x8xf32>
    %c0_75 = arith.constant 0 : index
    %c8 = arith.constant 8 : index
    %160 = memref.load %arg1[%c0_75, %c8] : memref<2x32xf32, #tpu.memory_space<smem>>
    %161 = vector.broadcast %160 : f32 to vector<1x8xf32>
    %162 = arith.mulf %161, %0 : vector<1x8xf32>
    %c1_76 = arith.constant 1 : index
    %c8_77 = arith.constant 8 : index
    %163 = memref.load %arg1[%c1_76, %c8_77] : memref<2x32xf32, #tpu.memory_space<smem>>
    %164 = vector.broadcast %163 : f32 to vector<1x8xf32>
    %165 = arith.mulf %164, %1 : vector<1x8xf32>
    %166 = arith.addf %162, %165 : vector<1x8xf32>
    %c8_78 = arith.constant 8 : index
    %167 = memref.load %arg2[%c8_78] : memref<32xf32, #tpu.memory_space<smem>>
    %168 = vector.broadcast %167 : f32 to vector<1x8xf32>
    %169 = arith.addf %166, %168 : vector<1x8xf32>
    %cst_79 = arith.constant 0.000000e+00 : f32
    %170 = vector.broadcast %cst_79 : f32 to vector<1x8xf32>
    %171 = arith.maximumf %169, %170 : vector<1x8xf32>
    %c0_80 = arith.constant 0 : index
    %c8_81 = arith.constant 8 : index
    %172 = memref.load %arg3[%c0_80, %c8_81] : memref<2x32xf32, #tpu.memory_space<smem>>
    %173 = vector.broadcast %172 : f32 to vector<1x8xf32>
    %174 = arith.mulf %173, %171 : vector<1x8xf32>
    %175 = arith.addf %155, %174 : vector<1x8xf32>
    %c1_82 = arith.constant 1 : index
    %c8_83 = arith.constant 8 : index
    %176 = memref.load %arg3[%c1_82, %c8_83] : memref<2x32xf32, #tpu.memory_space<smem>>
    %177 = vector.broadcast %176 : f32 to vector<1x8xf32>
    %178 = arith.mulf %177, %171 : vector<1x8xf32>
    %179 = arith.addf %159, %178 : vector<1x8xf32>
    %c0_84 = arith.constant 0 : index
    %c9 = arith.constant 9 : index
    %180 = memref.load %arg1[%c0_84, %c9] : memref<2x32xf32, #tpu.memory_space<smem>>
    %181 = vector.broadcast %180 : f32 to vector<1x8xf32>
    %182 = arith.mulf %181, %0 : vector<1x8xf32>
    %c1_85 = arith.constant 1 : index
    %c9_86 = arith.constant 9 : index
    %183 = memref.load %arg1[%c1_85, %c9_86] : memref<2x32xf32, #tpu.memory_space<smem>>
    %184 = vector.broadcast %183 : f32 to vector<1x8xf32>
    %185 = arith.mulf %184, %1 : vector<1x8xf32>
    %186 = arith.addf %182, %185 : vector<1x8xf32>
    %c9_87 = arith.constant 9 : index
    %187 = memref.load %arg2[%c9_87] : memref<32xf32, #tpu.memory_space<smem>>
    %188 = vector.broadcast %187 : f32 to vector<1x8xf32>
    %189 = arith.addf %186, %188 : vector<1x8xf32>
    %cst_88 = arith.constant 0.000000e+00 : f32
    %190 = vector.broadcast %cst_88 : f32 to vector<1x8xf32>
    %191 = arith.maximumf %189, %190 : vector<1x8xf32>
    %c0_89 = arith.constant 0 : index
    %c9_90 = arith.constant 9 : index
    %192 = memref.load %arg3[%c0_89, %c9_90] : memref<2x32xf32, #tpu.memory_space<smem>>
    %193 = vector.broadcast %192 : f32 to vector<1x8xf32>
    %194 = arith.mulf %193, %191 : vector<1x8xf32>
    %195 = arith.addf %175, %194 : vector<1x8xf32>
    %c1_91 = arith.constant 1 : index
    %c9_92 = arith.constant 9 : index
    %196 = memref.load %arg3[%c1_91, %c9_92] : memref<2x32xf32, #tpu.memory_space<smem>>
    %197 = vector.broadcast %196 : f32 to vector<1x8xf32>
    %198 = arith.mulf %197, %191 : vector<1x8xf32>
    %199 = arith.addf %179, %198 : vector<1x8xf32>
    %c0_93 = arith.constant 0 : index
    %c10 = arith.constant 10 : index
    %200 = memref.load %arg1[%c0_93, %c10] : memref<2x32xf32, #tpu.memory_space<smem>>
    %201 = vector.broadcast %200 : f32 to vector<1x8xf32>
    %202 = arith.mulf %201, %0 : vector<1x8xf32>
    %c1_94 = arith.constant 1 : index
    %c10_95 = arith.constant 10 : index
    %203 = memref.load %arg1[%c1_94, %c10_95] : memref<2x32xf32, #tpu.memory_space<smem>>
    %204 = vector.broadcast %203 : f32 to vector<1x8xf32>
    %205 = arith.mulf %204, %1 : vector<1x8xf32>
    %206 = arith.addf %202, %205 : vector<1x8xf32>
    %c10_96 = arith.constant 10 : index
    %207 = memref.load %arg2[%c10_96] : memref<32xf32, #tpu.memory_space<smem>>
    %208 = vector.broadcast %207 : f32 to vector<1x8xf32>
    %209 = arith.addf %206, %208 : vector<1x8xf32>
    %cst_97 = arith.constant 0.000000e+00 : f32
    %210 = vector.broadcast %cst_97 : f32 to vector<1x8xf32>
    %211 = arith.maximumf %209, %210 : vector<1x8xf32>
    %c0_98 = arith.constant 0 : index
    %c10_99 = arith.constant 10 : index
    %212 = memref.load %arg3[%c0_98, %c10_99] : memref<2x32xf32, #tpu.memory_space<smem>>
    %213 = vector.broadcast %212 : f32 to vector<1x8xf32>
    %214 = arith.mulf %213, %211 : vector<1x8xf32>
    %215 = arith.addf %195, %214 : vector<1x8xf32>
    %c1_100 = arith.constant 1 : index
    %c10_101 = arith.constant 10 : index
    %216 = memref.load %arg3[%c1_100, %c10_101] : memref<2x32xf32, #tpu.memory_space<smem>>
    %217 = vector.broadcast %216 : f32 to vector<1x8xf32>
    %218 = arith.mulf %217, %211 : vector<1x8xf32>
    %219 = arith.addf %199, %218 : vector<1x8xf32>
    %c0_102 = arith.constant 0 : index
    %c11 = arith.constant 11 : index
    %220 = memref.load %arg1[%c0_102, %c11] : memref<2x32xf32, #tpu.memory_space<smem>>
    %221 = vector.broadcast %220 : f32 to vector<1x8xf32>
    %222 = arith.mulf %221, %0 : vector<1x8xf32>
    %c1_103 = arith.constant 1 : index
    %c11_104 = arith.constant 11 : index
    %223 = memref.load %arg1[%c1_103, %c11_104] : memref<2x32xf32, #tpu.memory_space<smem>>
    %224 = vector.broadcast %223 : f32 to vector<1x8xf32>
    %225 = arith.mulf %224, %1 : vector<1x8xf32>
    %226 = arith.addf %222, %225 : vector<1x8xf32>
    %c11_105 = arith.constant 11 : index
    %227 = memref.load %arg2[%c11_105] : memref<32xf32, #tpu.memory_space<smem>>
    %228 = vector.broadcast %227 : f32 to vector<1x8xf32>
    %229 = arith.addf %226, %228 : vector<1x8xf32>
    %cst_106 = arith.constant 0.000000e+00 : f32
    %230 = vector.broadcast %cst_106 : f32 to vector<1x8xf32>
    %231 = arith.maximumf %229, %230 : vector<1x8xf32>
    %c0_107 = arith.constant 0 : index
    %c11_108 = arith.constant 11 : index
    %232 = memref.load %arg3[%c0_107, %c11_108] : memref<2x32xf32, #tpu.memory_space<smem>>
    %233 = vector.broadcast %232 : f32 to vector<1x8xf32>
    %234 = arith.mulf %233, %231 : vector<1x8xf32>
    %235 = arith.addf %215, %234 : vector<1x8xf32>
    %c1_109 = arith.constant 1 : index
    %c11_110 = arith.constant 11 : index
    %236 = memref.load %arg3[%c1_109, %c11_110] : memref<2x32xf32, #tpu.memory_space<smem>>
    %237 = vector.broadcast %236 : f32 to vector<1x8xf32>
    %238 = arith.mulf %237, %231 : vector<1x8xf32>
    %239 = arith.addf %219, %238 : vector<1x8xf32>
    %c0_111 = arith.constant 0 : index
    %c12 = arith.constant 12 : index
    %240 = memref.load %arg1[%c0_111, %c12] : memref<2x32xf32, #tpu.memory_space<smem>>
    %241 = vector.broadcast %240 : f32 to vector<1x8xf32>
    %242 = arith.mulf %241, %0 : vector<1x8xf32>
    %c1_112 = arith.constant 1 : index
    %c12_113 = arith.constant 12 : index
    %243 = memref.load %arg1[%c1_112, %c12_113] : memref<2x32xf32, #tpu.memory_space<smem>>
    %244 = vector.broadcast %243 : f32 to vector<1x8xf32>
    %245 = arith.mulf %244, %1 : vector<1x8xf32>
    %246 = arith.addf %242, %245 : vector<1x8xf32>
    %c12_114 = arith.constant 12 : index
    %247 = memref.load %arg2[%c12_114] : memref<32xf32, #tpu.memory_space<smem>>
    %248 = vector.broadcast %247 : f32 to vector<1x8xf32>
    %249 = arith.addf %246, %248 : vector<1x8xf32>
    %cst_115 = arith.constant 0.000000e+00 : f32
    %250 = vector.broadcast %cst_115 : f32 to vector<1x8xf32>
    %251 = arith.maximumf %249, %250 : vector<1x8xf32>
    %c0_116 = arith.constant 0 : index
    %c12_117 = arith.constant 12 : index
    %252 = memref.load %arg3[%c0_116, %c12_117] : memref<2x32xf32, #tpu.memory_space<smem>>
    %253 = vector.broadcast %252 : f32 to vector<1x8xf32>
    %254 = arith.mulf %253, %251 : vector<1x8xf32>
    %255 = arith.addf %235, %254 : vector<1x8xf32>
    %c1_118 = arith.constant 1 : index
    %c12_119 = arith.constant 12 : index
    %256 = memref.load %arg3[%c1_118, %c12_119] : memref<2x32xf32, #tpu.memory_space<smem>>
    %257 = vector.broadcast %256 : f32 to vector<1x8xf32>
    %258 = arith.mulf %257, %251 : vector<1x8xf32>
    %259 = arith.addf %239, %258 : vector<1x8xf32>
    %c0_120 = arith.constant 0 : index
    %c13 = arith.constant 13 : index
    %260 = memref.load %arg1[%c0_120, %c13] : memref<2x32xf32, #tpu.memory_space<smem>>
    %261 = vector.broadcast %260 : f32 to vector<1x8xf32>
    %262 = arith.mulf %261, %0 : vector<1x8xf32>
    %c1_121 = arith.constant 1 : index
    %c13_122 = arith.constant 13 : index
    %263 = memref.load %arg1[%c1_121, %c13_122] : memref<2x32xf32, #tpu.memory_space<smem>>
    %264 = vector.broadcast %263 : f32 to vector<1x8xf32>
    %265 = arith.mulf %264, %1 : vector<1x8xf32>
    %266 = arith.addf %262, %265 : vector<1x8xf32>
    %c13_123 = arith.constant 13 : index
    %267 = memref.load %arg2[%c13_123] : memref<32xf32, #tpu.memory_space<smem>>
    %268 = vector.broadcast %267 : f32 to vector<1x8xf32>
    %269 = arith.addf %266, %268 : vector<1x8xf32>
    %cst_124 = arith.constant 0.000000e+00 : f32
    %270 = vector.broadcast %cst_124 : f32 to vector<1x8xf32>
    %271 = arith.maximumf %269, %270 : vector<1x8xf32>
    %c0_125 = arith.constant 0 : index
    %c13_126 = arith.constant 13 : index
    %272 = memref.load %arg3[%c0_125, %c13_126] : memref<2x32xf32, #tpu.memory_space<smem>>
    %273 = vector.broadcast %272 : f32 to vector<1x8xf32>
    %274 = arith.mulf %273, %271 : vector<1x8xf32>
    %275 = arith.addf %255, %274 : vector<1x8xf32>
    %c1_127 = arith.constant 1 : index
    %c13_128 = arith.constant 13 : index
    %276 = memref.load %arg3[%c1_127, %c13_128] : memref<2x32xf32, #tpu.memory_space<smem>>
    %277 = vector.broadcast %276 : f32 to vector<1x8xf32>
    %278 = arith.mulf %277, %271 : vector<1x8xf32>
    %279 = arith.addf %259, %278 : vector<1x8xf32>
    %c0_129 = arith.constant 0 : index
    %c14 = arith.constant 14 : index
    %280 = memref.load %arg1[%c0_129, %c14] : memref<2x32xf32, #tpu.memory_space<smem>>
    %281 = vector.broadcast %280 : f32 to vector<1x8xf32>
    %282 = arith.mulf %281, %0 : vector<1x8xf32>
    %c1_130 = arith.constant 1 : index
    %c14_131 = arith.constant 14 : index
    %283 = memref.load %arg1[%c1_130, %c14_131] : memref<2x32xf32, #tpu.memory_space<smem>>
    %284 = vector.broadcast %283 : f32 to vector<1x8xf32>
    %285 = arith.mulf %284, %1 : vector<1x8xf32>
    %286 = arith.addf %282, %285 : vector<1x8xf32>
    %c14_132 = arith.constant 14 : index
    %287 = memref.load %arg2[%c14_132] : memref<32xf32, #tpu.memory_space<smem>>
    %288 = vector.broadcast %287 : f32 to vector<1x8xf32>
    %289 = arith.addf %286, %288 : vector<1x8xf32>
    %cst_133 = arith.constant 0.000000e+00 : f32
    %290 = vector.broadcast %cst_133 : f32 to vector<1x8xf32>
    %291 = arith.maximumf %289, %290 : vector<1x8xf32>
    %c0_134 = arith.constant 0 : index
    %c14_135 = arith.constant 14 : index
    %292 = memref.load %arg3[%c0_134, %c14_135] : memref<2x32xf32, #tpu.memory_space<smem>>
    %293 = vector.broadcast %292 : f32 to vector<1x8xf32>
    %294 = arith.mulf %293, %291 : vector<1x8xf32>
    %295 = arith.addf %275, %294 : vector<1x8xf32>
    %c1_136 = arith.constant 1 : index
    %c14_137 = arith.constant 14 : index
    %296 = memref.load %arg3[%c1_136, %c14_137] : memref<2x32xf32, #tpu.memory_space<smem>>
    %297 = vector.broadcast %296 : f32 to vector<1x8xf32>
    %298 = arith.mulf %297, %291 : vector<1x8xf32>
    %299 = arith.addf %279, %298 : vector<1x8xf32>
    %c0_138 = arith.constant 0 : index
    %c15 = arith.constant 15 : index
    %300 = memref.load %arg1[%c0_138, %c15] : memref<2x32xf32, #tpu.memory_space<smem>>
    %301 = vector.broadcast %300 : f32 to vector<1x8xf32>
    %302 = arith.mulf %301, %0 : vector<1x8xf32>
    %c1_139 = arith.constant 1 : index
    %c15_140 = arith.constant 15 : index
    %303 = memref.load %arg1[%c1_139, %c15_140] : memref<2x32xf32, #tpu.memory_space<smem>>
    %304 = vector.broadcast %303 : f32 to vector<1x8xf32>
    %305 = arith.mulf %304, %1 : vector<1x8xf32>
    %306 = arith.addf %302, %305 : vector<1x8xf32>
    %c15_141 = arith.constant 15 : index
    %307 = memref.load %arg2[%c15_141] : memref<32xf32, #tpu.memory_space<smem>>
    %308 = vector.broadcast %307 : f32 to vector<1x8xf32>
    %309 = arith.addf %306, %308 : vector<1x8xf32>
    %cst_142 = arith.constant 0.000000e+00 : f32
    %310 = vector.broadcast %cst_142 : f32 to vector<1x8xf32>
    %311 = arith.maximumf %309, %310 : vector<1x8xf32>
    %c0_143 = arith.constant 0 : index
    %c15_144 = arith.constant 15 : index
    %312 = memref.load %arg3[%c0_143, %c15_144] : memref<2x32xf32, #tpu.memory_space<smem>>
    %313 = vector.broadcast %312 : f32 to vector<1x8xf32>
    %314 = arith.mulf %313, %311 : vector<1x8xf32>
    %315 = arith.addf %295, %314 : vector<1x8xf32>
    %c1_145 = arith.constant 1 : index
    %c15_146 = arith.constant 15 : index
    %316 = memref.load %arg3[%c1_145, %c15_146] : memref<2x32xf32, #tpu.memory_space<smem>>
    %317 = vector.broadcast %316 : f32 to vector<1x8xf32>
    %318 = arith.mulf %317, %311 : vector<1x8xf32>
    %319 = arith.addf %299, %318 : vector<1x8xf32>
    %c0_147 = arith.constant 0 : index
    %c16 = arith.constant 16 : index
    %320 = memref.load %arg1[%c0_147, %c16] : memref<2x32xf32, #tpu.memory_space<smem>>
    %321 = vector.broadcast %320 : f32 to vector<1x8xf32>
    %322 = arith.mulf %321, %0 : vector<1x8xf32>
    %c1_148 = arith.constant 1 : index
    %c16_149 = arith.constant 16 : index
    %323 = memref.load %arg1[%c1_148, %c16_149] : memref<2x32xf32, #tpu.memory_space<smem>>
    %324 = vector.broadcast %323 : f32 to vector<1x8xf32>
    %325 = arith.mulf %324, %1 : vector<1x8xf32>
    %326 = arith.addf %322, %325 : vector<1x8xf32>
    %c16_150 = arith.constant 16 : index
    %327 = memref.load %arg2[%c16_150] : memref<32xf32, #tpu.memory_space<smem>>
    %328 = vector.broadcast %327 : f32 to vector<1x8xf32>
    %329 = arith.addf %326, %328 : vector<1x8xf32>
    %cst_151 = arith.constant 0.000000e+00 : f32
    %330 = vector.broadcast %cst_151 : f32 to vector<1x8xf32>
    %331 = arith.maximumf %329, %330 : vector<1x8xf32>
    %c0_152 = arith.constant 0 : index
    %c16_153 = arith.constant 16 : index
    %332 = memref.load %arg3[%c0_152, %c16_153] : memref<2x32xf32, #tpu.memory_space<smem>>
    %333 = vector.broadcast %332 : f32 to vector<1x8xf32>
    %334 = arith.mulf %333, %331 : vector<1x8xf32>
    %335 = arith.addf %315, %334 : vector<1x8xf32>
    %c1_154 = arith.constant 1 : index
    %c16_155 = arith.constant 16 : index
    %336 = memref.load %arg3[%c1_154, %c16_155] : memref<2x32xf32, #tpu.memory_space<smem>>
    %337 = vector.broadcast %336 : f32 to vector<1x8xf32>
    %338 = arith.mulf %337, %331 : vector<1x8xf32>
    %339 = arith.addf %319, %338 : vector<1x8xf32>
    %c0_156 = arith.constant 0 : index
    %c17 = arith.constant 17 : index
    %340 = memref.load %arg1[%c0_156, %c17] : memref<2x32xf32, #tpu.memory_space<smem>>
    %341 = vector.broadcast %340 : f32 to vector<1x8xf32>
    %342 = arith.mulf %341, %0 : vector<1x8xf32>
    %c1_157 = arith.constant 1 : index
    %c17_158 = arith.constant 17 : index
    %343 = memref.load %arg1[%c1_157, %c17_158] : memref<2x32xf32, #tpu.memory_space<smem>>
    %344 = vector.broadcast %343 : f32 to vector<1x8xf32>
    %345 = arith.mulf %344, %1 : vector<1x8xf32>
    %346 = arith.addf %342, %345 : vector<1x8xf32>
    %c17_159 = arith.constant 17 : index
    %347 = memref.load %arg2[%c17_159] : memref<32xf32, #tpu.memory_space<smem>>
    %348 = vector.broadcast %347 : f32 to vector<1x8xf32>
    %349 = arith.addf %346, %348 : vector<1x8xf32>
    %cst_160 = arith.constant 0.000000e+00 : f32
    %350 = vector.broadcast %cst_160 : f32 to vector<1x8xf32>
    %351 = arith.maximumf %349, %350 : vector<1x8xf32>
    %c0_161 = arith.constant 0 : index
    %c17_162 = arith.constant 17 : index
    %352 = memref.load %arg3[%c0_161, %c17_162] : memref<2x32xf32, #tpu.memory_space<smem>>
    %353 = vector.broadcast %352 : f32 to vector<1x8xf32>
    %354 = arith.mulf %353, %351 : vector<1x8xf32>
    %355 = arith.addf %335, %354 : vector<1x8xf32>
    %c1_163 = arith.constant 1 : index
    %c17_164 = arith.constant 17 : index
    %356 = memref.load %arg3[%c1_163, %c17_164] : memref<2x32xf32, #tpu.memory_space<smem>>
    %357 = vector.broadcast %356 : f32 to vector<1x8xf32>
    %358 = arith.mulf %357, %351 : vector<1x8xf32>
    %359 = arith.addf %339, %358 : vector<1x8xf32>
    %c0_165 = arith.constant 0 : index
    %c18 = arith.constant 18 : index
    %360 = memref.load %arg1[%c0_165, %c18] : memref<2x32xf32, #tpu.memory_space<smem>>
    %361 = vector.broadcast %360 : f32 to vector<1x8xf32>
    %362 = arith.mulf %361, %0 : vector<1x8xf32>
    %c1_166 = arith.constant 1 : index
    %c18_167 = arith.constant 18 : index
    %363 = memref.load %arg1[%c1_166, %c18_167] : memref<2x32xf32, #tpu.memory_space<smem>>
    %364 = vector.broadcast %363 : f32 to vector<1x8xf32>
    %365 = arith.mulf %364, %1 : vector<1x8xf32>
    %366 = arith.addf %362, %365 : vector<1x8xf32>
    %c18_168 = arith.constant 18 : index
    %367 = memref.load %arg2[%c18_168] : memref<32xf32, #tpu.memory_space<smem>>
    %368 = vector.broadcast %367 : f32 to vector<1x8xf32>
    %369 = arith.addf %366, %368 : vector<1x8xf32>
    %cst_169 = arith.constant 0.000000e+00 : f32
    %370 = vector.broadcast %cst_169 : f32 to vector<1x8xf32>
    %371 = arith.maximumf %369, %370 : vector<1x8xf32>
    %c0_170 = arith.constant 0 : index
    %c18_171 = arith.constant 18 : index
    %372 = memref.load %arg3[%c0_170, %c18_171] : memref<2x32xf32, #tpu.memory_space<smem>>
    %373 = vector.broadcast %372 : f32 to vector<1x8xf32>
    %374 = arith.mulf %373, %371 : vector<1x8xf32>
    %375 = arith.addf %355, %374 : vector<1x8xf32>
    %c1_172 = arith.constant 1 : index
    %c18_173 = arith.constant 18 : index
    %376 = memref.load %arg3[%c1_172, %c18_173] : memref<2x32xf32, #tpu.memory_space<smem>>
    %377 = vector.broadcast %376 : f32 to vector<1x8xf32>
    %378 = arith.mulf %377, %371 : vector<1x8xf32>
    %379 = arith.addf %359, %378 : vector<1x8xf32>
    %c0_174 = arith.constant 0 : index
    %c19 = arith.constant 19 : index
    %380 = memref.load %arg1[%c0_174, %c19] : memref<2x32xf32, #tpu.memory_space<smem>>
    %381 = vector.broadcast %380 : f32 to vector<1x8xf32>
    %382 = arith.mulf %381, %0 : vector<1x8xf32>
    %c1_175 = arith.constant 1 : index
    %c19_176 = arith.constant 19 : index
    %383 = memref.load %arg1[%c1_175, %c19_176] : memref<2x32xf32, #tpu.memory_space<smem>>
    %384 = vector.broadcast %383 : f32 to vector<1x8xf32>
    %385 = arith.mulf %384, %1 : vector<1x8xf32>
    %386 = arith.addf %382, %385 : vector<1x8xf32>
    %c19_177 = arith.constant 19 : index
    %387 = memref.load %arg2[%c19_177] : memref<32xf32, #tpu.memory_space<smem>>
    %388 = vector.broadcast %387 : f32 to vector<1x8xf32>
    %389 = arith.addf %386, %388 : vector<1x8xf32>
    %cst_178 = arith.constant 0.000000e+00 : f32
    %390 = vector.broadcast %cst_178 : f32 to vector<1x8xf32>
    %391 = arith.maximumf %389, %390 : vector<1x8xf32>
    %c0_179 = arith.constant 0 : index
    %c19_180 = arith.constant 19 : index
    %392 = memref.load %arg3[%c0_179, %c19_180] : memref<2x32xf32, #tpu.memory_space<smem>>
    %393 = vector.broadcast %392 : f32 to vector<1x8xf32>
    %394 = arith.mulf %393, %391 : vector<1x8xf32>
    %395 = arith.addf %375, %394 : vector<1x8xf32>
    %c1_181 = arith.constant 1 : index
    %c19_182 = arith.constant 19 : index
    %396 = memref.load %arg3[%c1_181, %c19_182] : memref<2x32xf32, #tpu.memory_space<smem>>
    %397 = vector.broadcast %396 : f32 to vector<1x8xf32>
    %398 = arith.mulf %397, %391 : vector<1x8xf32>
    %399 = arith.addf %379, %398 : vector<1x8xf32>
    %c0_183 = arith.constant 0 : index
    %c20 = arith.constant 20 : index
    %400 = memref.load %arg1[%c0_183, %c20] : memref<2x32xf32, #tpu.memory_space<smem>>
    %401 = vector.broadcast %400 : f32 to vector<1x8xf32>
    %402 = arith.mulf %401, %0 : vector<1x8xf32>
    %c1_184 = arith.constant 1 : index
    %c20_185 = arith.constant 20 : index
    %403 = memref.load %arg1[%c1_184, %c20_185] : memref<2x32xf32, #tpu.memory_space<smem>>
    %404 = vector.broadcast %403 : f32 to vector<1x8xf32>
    %405 = arith.mulf %404, %1 : vector<1x8xf32>
    %406 = arith.addf %402, %405 : vector<1x8xf32>
    %c20_186 = arith.constant 20 : index
    %407 = memref.load %arg2[%c20_186] : memref<32xf32, #tpu.memory_space<smem>>
    %408 = vector.broadcast %407 : f32 to vector<1x8xf32>
    %409 = arith.addf %406, %408 : vector<1x8xf32>
    %cst_187 = arith.constant 0.000000e+00 : f32
    %410 = vector.broadcast %cst_187 : f32 to vector<1x8xf32>
    %411 = arith.maximumf %409, %410 : vector<1x8xf32>
    %c0_188 = arith.constant 0 : index
    %c20_189 = arith.constant 20 : index
    %412 = memref.load %arg3[%c0_188, %c20_189] : memref<2x32xf32, #tpu.memory_space<smem>>
    %413 = vector.broadcast %412 : f32 to vector<1x8xf32>
    %414 = arith.mulf %413, %411 : vector<1x8xf32>
    %415 = arith.addf %395, %414 : vector<1x8xf32>
    %c1_190 = arith.constant 1 : index
    %c20_191 = arith.constant 20 : index
    %416 = memref.load %arg3[%c1_190, %c20_191] : memref<2x32xf32, #tpu.memory_space<smem>>
    %417 = vector.broadcast %416 : f32 to vector<1x8xf32>
    %418 = arith.mulf %417, %411 : vector<1x8xf32>
    %419 = arith.addf %399, %418 : vector<1x8xf32>
    %c0_192 = arith.constant 0 : index
    %c21 = arith.constant 21 : index
    %420 = memref.load %arg1[%c0_192, %c21] : memref<2x32xf32, #tpu.memory_space<smem>>
    %421 = vector.broadcast %420 : f32 to vector<1x8xf32>
    %422 = arith.mulf %421, %0 : vector<1x8xf32>
    %c1_193 = arith.constant 1 : index
    %c21_194 = arith.constant 21 : index
    %423 = memref.load %arg1[%c1_193, %c21_194] : memref<2x32xf32, #tpu.memory_space<smem>>
    %424 = vector.broadcast %423 : f32 to vector<1x8xf32>
    %425 = arith.mulf %424, %1 : vector<1x8xf32>
    %426 = arith.addf %422, %425 : vector<1x8xf32>
    %c21_195 = arith.constant 21 : index
    %427 = memref.load %arg2[%c21_195] : memref<32xf32, #tpu.memory_space<smem>>
    %428 = vector.broadcast %427 : f32 to vector<1x8xf32>
    %429 = arith.addf %426, %428 : vector<1x8xf32>
    %cst_196 = arith.constant 0.000000e+00 : f32
    %430 = vector.broadcast %cst_196 : f32 to vector<1x8xf32>
    %431 = arith.maximumf %429, %430 : vector<1x8xf32>
    %c0_197 = arith.constant 0 : index
    %c21_198 = arith.constant 21 : index
    %432 = memref.load %arg3[%c0_197, %c21_198] : memref<2x32xf32, #tpu.memory_space<smem>>
    %433 = vector.broadcast %432 : f32 to vector<1x8xf32>
    %434 = arith.mulf %433, %431 : vector<1x8xf32>
    %435 = arith.addf %415, %434 : vector<1x8xf32>
    %c1_199 = arith.constant 1 : index
    %c21_200 = arith.constant 21 : index
    %436 = memref.load %arg3[%c1_199, %c21_200] : memref<2x32xf32, #tpu.memory_space<smem>>
    %437 = vector.broadcast %436 : f32 to vector<1x8xf32>
    %438 = arith.mulf %437, %431 : vector<1x8xf32>
    %439 = arith.addf %419, %438 : vector<1x8xf32>
    %c0_201 = arith.constant 0 : index
    %c22 = arith.constant 22 : index
    %440 = memref.load %arg1[%c0_201, %c22] : memref<2x32xf32, #tpu.memory_space<smem>>
    %441 = vector.broadcast %440 : f32 to vector<1x8xf32>
    %442 = arith.mulf %441, %0 : vector<1x8xf32>
    %c1_202 = arith.constant 1 : index
    %c22_203 = arith.constant 22 : index
    %443 = memref.load %arg1[%c1_202, %c22_203] : memref<2x32xf32, #tpu.memory_space<smem>>
    %444 = vector.broadcast %443 : f32 to vector<1x8xf32>
    %445 = arith.mulf %444, %1 : vector<1x8xf32>
    %446 = arith.addf %442, %445 : vector<1x8xf32>
    %c22_204 = arith.constant 22 : index
    %447 = memref.load %arg2[%c22_204] : memref<32xf32, #tpu.memory_space<smem>>
    %448 = vector.broadcast %447 : f32 to vector<1x8xf32>
    %449 = arith.addf %446, %448 : vector<1x8xf32>
    %cst_205 = arith.constant 0.000000e+00 : f32
    %450 = vector.broadcast %cst_205 : f32 to vector<1x8xf32>
    %451 = arith.maximumf %449, %450 : vector<1x8xf32>
    %c0_206 = arith.constant 0 : index
    %c22_207 = arith.constant 22 : index
    %452 = memref.load %arg3[%c0_206, %c22_207] : memref<2x32xf32, #tpu.memory_space<smem>>
    %453 = vector.broadcast %452 : f32 to vector<1x8xf32>
    %454 = arith.mulf %453, %451 : vector<1x8xf32>
    %455 = arith.addf %435, %454 : vector<1x8xf32>
    %c1_208 = arith.constant 1 : index
    %c22_209 = arith.constant 22 : index
    %456 = memref.load %arg3[%c1_208, %c22_209] : memref<2x32xf32, #tpu.memory_space<smem>>
    %457 = vector.broadcast %456 : f32 to vector<1x8xf32>
    %458 = arith.mulf %457, %451 : vector<1x8xf32>
    %459 = arith.addf %439, %458 : vector<1x8xf32>
    %c0_210 = arith.constant 0 : index
    %c23 = arith.constant 23 : index
    %460 = memref.load %arg1[%c0_210, %c23] : memref<2x32xf32, #tpu.memory_space<smem>>
    %461 = vector.broadcast %460 : f32 to vector<1x8xf32>
    %462 = arith.mulf %461, %0 : vector<1x8xf32>
    %c1_211 = arith.constant 1 : index
    %c23_212 = arith.constant 23 : index
    %463 = memref.load %arg1[%c1_211, %c23_212] : memref<2x32xf32, #tpu.memory_space<smem>>
    %464 = vector.broadcast %463 : f32 to vector<1x8xf32>
    %465 = arith.mulf %464, %1 : vector<1x8xf32>
    %466 = arith.addf %462, %465 : vector<1x8xf32>
    %c23_213 = arith.constant 23 : index
    %467 = memref.load %arg2[%c23_213] : memref<32xf32, #tpu.memory_space<smem>>
    %468 = vector.broadcast %467 : f32 to vector<1x8xf32>
    %469 = arith.addf %466, %468 : vector<1x8xf32>
    %cst_214 = arith.constant 0.000000e+00 : f32
    %470 = vector.broadcast %cst_214 : f32 to vector<1x8xf32>
    %471 = arith.maximumf %469, %470 : vector<1x8xf32>
    %c0_215 = arith.constant 0 : index
    %c23_216 = arith.constant 23 : index
    %472 = memref.load %arg3[%c0_215, %c23_216] : memref<2x32xf32, #tpu.memory_space<smem>>
    %473 = vector.broadcast %472 : f32 to vector<1x8xf32>
    %474 = arith.mulf %473, %471 : vector<1x8xf32>
    %475 = arith.addf %455, %474 : vector<1x8xf32>
    %c1_217 = arith.constant 1 : index
    %c23_218 = arith.constant 23 : index
    %476 = memref.load %arg3[%c1_217, %c23_218] : memref<2x32xf32, #tpu.memory_space<smem>>
    %477 = vector.broadcast %476 : f32 to vector<1x8xf32>
    %478 = arith.mulf %477, %471 : vector<1x8xf32>
    %479 = arith.addf %459, %478 : vector<1x8xf32>
    %c0_219 = arith.constant 0 : index
    %c24 = arith.constant 24 : index
    %480 = memref.load %arg1[%c0_219, %c24] : memref<2x32xf32, #tpu.memory_space<smem>>
    %481 = vector.broadcast %480 : f32 to vector<1x8xf32>
    %482 = arith.mulf %481, %0 : vector<1x8xf32>
    %c1_220 = arith.constant 1 : index
    %c24_221 = arith.constant 24 : index
    %483 = memref.load %arg1[%c1_220, %c24_221] : memref<2x32xf32, #tpu.memory_space<smem>>
    %484 = vector.broadcast %483 : f32 to vector<1x8xf32>
    %485 = arith.mulf %484, %1 : vector<1x8xf32>
    %486 = arith.addf %482, %485 : vector<1x8xf32>
    %c24_222 = arith.constant 24 : index
    %487 = memref.load %arg2[%c24_222] : memref<32xf32, #tpu.memory_space<smem>>
    %488 = vector.broadcast %487 : f32 to vector<1x8xf32>
    %489 = arith.addf %486, %488 : vector<1x8xf32>
    %cst_223 = arith.constant 0.000000e+00 : f32
    %490 = vector.broadcast %cst_223 : f32 to vector<1x8xf32>
    %491 = arith.maximumf %489, %490 : vector<1x8xf32>
    %c0_224 = arith.constant 0 : index
    %c24_225 = arith.constant 24 : index
    %492 = memref.load %arg3[%c0_224, %c24_225] : memref<2x32xf32, #tpu.memory_space<smem>>
    %493 = vector.broadcast %492 : f32 to vector<1x8xf32>
    %494 = arith.mulf %493, %491 : vector<1x8xf32>
    %495 = arith.addf %475, %494 : vector<1x8xf32>
    %c1_226 = arith.constant 1 : index
    %c24_227 = arith.constant 24 : index
    %496 = memref.load %arg3[%c1_226, %c24_227] : memref<2x32xf32, #tpu.memory_space<smem>>
    %497 = vector.broadcast %496 : f32 to vector<1x8xf32>
    %498 = arith.mulf %497, %491 : vector<1x8xf32>
    %499 = arith.addf %479, %498 : vector<1x8xf32>
    %c0_228 = arith.constant 0 : index
    %c25 = arith.constant 25 : index
    %500 = memref.load %arg1[%c0_228, %c25] : memref<2x32xf32, #tpu.memory_space<smem>>
    %501 = vector.broadcast %500 : f32 to vector<1x8xf32>
    %502 = arith.mulf %501, %0 : vector<1x8xf32>
    %c1_229 = arith.constant 1 : index
    %c25_230 = arith.constant 25 : index
    %503 = memref.load %arg1[%c1_229, %c25_230] : memref<2x32xf32, #tpu.memory_space<smem>>
    %504 = vector.broadcast %503 : f32 to vector<1x8xf32>
    %505 = arith.mulf %504, %1 : vector<1x8xf32>
    %506 = arith.addf %502, %505 : vector<1x8xf32>
    %c25_231 = arith.constant 25 : index
    %507 = memref.load %arg2[%c25_231] : memref<32xf32, #tpu.memory_space<smem>>
    %508 = vector.broadcast %507 : f32 to vector<1x8xf32>
    %509 = arith.addf %506, %508 : vector<1x8xf32>
    %cst_232 = arith.constant 0.000000e+00 : f32
    %510 = vector.broadcast %cst_232 : f32 to vector<1x8xf32>
    %511 = arith.maximumf %509, %510 : vector<1x8xf32>
    %c0_233 = arith.constant 0 : index
    %c25_234 = arith.constant 25 : index
    %512 = memref.load %arg3[%c0_233, %c25_234] : memref<2x32xf32, #tpu.memory_space<smem>>
    %513 = vector.broadcast %512 : f32 to vector<1x8xf32>
    %514 = arith.mulf %513, %511 : vector<1x8xf32>
    %515 = arith.addf %495, %514 : vector<1x8xf32>
    %c1_235 = arith.constant 1 : index
    %c25_236 = arith.constant 25 : index
    %516 = memref.load %arg3[%c1_235, %c25_236] : memref<2x32xf32, #tpu.memory_space<smem>>
    %517 = vector.broadcast %516 : f32 to vector<1x8xf32>
    %518 = arith.mulf %517, %511 : vector<1x8xf32>
    %519 = arith.addf %499, %518 : vector<1x8xf32>
    %c0_237 = arith.constant 0 : index
    %c26 = arith.constant 26 : index
    %520 = memref.load %arg1[%c0_237, %c26] : memref<2x32xf32, #tpu.memory_space<smem>>
    %521 = vector.broadcast %520 : f32 to vector<1x8xf32>
    %522 = arith.mulf %521, %0 : vector<1x8xf32>
    %c1_238 = arith.constant 1 : index
    %c26_239 = arith.constant 26 : index
    %523 = memref.load %arg1[%c1_238, %c26_239] : memref<2x32xf32, #tpu.memory_space<smem>>
    %524 = vector.broadcast %523 : f32 to vector<1x8xf32>
    %525 = arith.mulf %524, %1 : vector<1x8xf32>
    %526 = arith.addf %522, %525 : vector<1x8xf32>
    %c26_240 = arith.constant 26 : index
    %527 = memref.load %arg2[%c26_240] : memref<32xf32, #tpu.memory_space<smem>>
    %528 = vector.broadcast %527 : f32 to vector<1x8xf32>
    %529 = arith.addf %526, %528 : vector<1x8xf32>
    %cst_241 = arith.constant 0.000000e+00 : f32
    %530 = vector.broadcast %cst_241 : f32 to vector<1x8xf32>
    %531 = arith.maximumf %529, %530 : vector<1x8xf32>
    %c0_242 = arith.constant 0 : index
    %c26_243 = arith.constant 26 : index
    %532 = memref.load %arg3[%c0_242, %c26_243] : memref<2x32xf32, #tpu.memory_space<smem>>
    %533 = vector.broadcast %532 : f32 to vector<1x8xf32>
    %534 = arith.mulf %533, %531 : vector<1x8xf32>
    %535 = arith.addf %515, %534 : vector<1x8xf32>
    %c1_244 = arith.constant 1 : index
    %c26_245 = arith.constant 26 : index
    %536 = memref.load %arg3[%c1_244, %c26_245] : memref<2x32xf32, #tpu.memory_space<smem>>
    %537 = vector.broadcast %536 : f32 to vector<1x8xf32>
    %538 = arith.mulf %537, %531 : vector<1x8xf32>
    %539 = arith.addf %519, %538 : vector<1x8xf32>
    %c0_246 = arith.constant 0 : index
    %c27 = arith.constant 27 : index
    %540 = memref.load %arg1[%c0_246, %c27] : memref<2x32xf32, #tpu.memory_space<smem>>
    %541 = vector.broadcast %540 : f32 to vector<1x8xf32>
    %542 = arith.mulf %541, %0 : vector<1x8xf32>
    %c1_247 = arith.constant 1 : index
    %c27_248 = arith.constant 27 : index
    %543 = memref.load %arg1[%c1_247, %c27_248] : memref<2x32xf32, #tpu.memory_space<smem>>
    %544 = vector.broadcast %543 : f32 to vector<1x8xf32>
    %545 = arith.mulf %544, %1 : vector<1x8xf32>
    %546 = arith.addf %542, %545 : vector<1x8xf32>
    %c27_249 = arith.constant 27 : index
    %547 = memref.load %arg2[%c27_249] : memref<32xf32, #tpu.memory_space<smem>>
    %548 = vector.broadcast %547 : f32 to vector<1x8xf32>
    %549 = arith.addf %546, %548 : vector<1x8xf32>
    %cst_250 = arith.constant 0.000000e+00 : f32
    %550 = vector.broadcast %cst_250 : f32 to vector<1x8xf32>
    %551 = arith.maximumf %549, %550 : vector<1x8xf32>
    %c0_251 = arith.constant 0 : index
    %c27_252 = arith.constant 27 : index
    %552 = memref.load %arg3[%c0_251, %c27_252] : memref<2x32xf32, #tpu.memory_space<smem>>
    %553 = vector.broadcast %552 : f32 to vector<1x8xf32>
    %554 = arith.mulf %553, %551 : vector<1x8xf32>
    %555 = arith.addf %535, %554 : vector<1x8xf32>
    %c1_253 = arith.constant 1 : index
    %c27_254 = arith.constant 27 : index
    %556 = memref.load %arg3[%c1_253, %c27_254] : memref<2x32xf32, #tpu.memory_space<smem>>
    %557 = vector.broadcast %556 : f32 to vector<1x8xf32>
    %558 = arith.mulf %557, %551 : vector<1x8xf32>
    %559 = arith.addf %539, %558 : vector<1x8xf32>
    %c0_255 = arith.constant 0 : index
    %c28 = arith.constant 28 : index
    %560 = memref.load %arg1[%c0_255, %c28] : memref<2x32xf32, #tpu.memory_space<smem>>
    %561 = vector.broadcast %560 : f32 to vector<1x8xf32>
    %562 = arith.mulf %561, %0 : vector<1x8xf32>
    %c1_256 = arith.constant 1 : index
    %c28_257 = arith.constant 28 : index
    %563 = memref.load %arg1[%c1_256, %c28_257] : memref<2x32xf32, #tpu.memory_space<smem>>
    %564 = vector.broadcast %563 : f32 to vector<1x8xf32>
    %565 = arith.mulf %564, %1 : vector<1x8xf32>
    %566 = arith.addf %562, %565 : vector<1x8xf32>
    %c28_258 = arith.constant 28 : index
    %567 = memref.load %arg2[%c28_258] : memref<32xf32, #tpu.memory_space<smem>>
    %568 = vector.broadcast %567 : f32 to vector<1x8xf32>
    %569 = arith.addf %566, %568 : vector<1x8xf32>
    %cst_259 = arith.constant 0.000000e+00 : f32
    %570 = vector.broadcast %cst_259 : f32 to vector<1x8xf32>
    %571 = arith.maximumf %569, %570 : vector<1x8xf32>
    %c0_260 = arith.constant 0 : index
    %c28_261 = arith.constant 28 : index
    %572 = memref.load %arg3[%c0_260, %c28_261] : memref<2x32xf32, #tpu.memory_space<smem>>
    %573 = vector.broadcast %572 : f32 to vector<1x8xf32>
    %574 = arith.mulf %573, %571 : vector<1x8xf32>
    %575 = arith.addf %555, %574 : vector<1x8xf32>
    %c1_262 = arith.constant 1 : index
    %c28_263 = arith.constant 28 : index
    %576 = memref.load %arg3[%c1_262, %c28_263] : memref<2x32xf32, #tpu.memory_space<smem>>
    %577 = vector.broadcast %576 : f32 to vector<1x8xf32>
    %578 = arith.mulf %577, %571 : vector<1x8xf32>
    %579 = arith.addf %559, %578 : vector<1x8xf32>
    %c0_264 = arith.constant 0 : index
    %c29 = arith.constant 29 : index
    %580 = memref.load %arg1[%c0_264, %c29] : memref<2x32xf32, #tpu.memory_space<smem>>
    %581 = vector.broadcast %580 : f32 to vector<1x8xf32>
    %582 = arith.mulf %581, %0 : vector<1x8xf32>
    %c1_265 = arith.constant 1 : index
    %c29_266 = arith.constant 29 : index
    %583 = memref.load %arg1[%c1_265, %c29_266] : memref<2x32xf32, #tpu.memory_space<smem>>
    %584 = vector.broadcast %583 : f32 to vector<1x8xf32>
    %585 = arith.mulf %584, %1 : vector<1x8xf32>
    %586 = arith.addf %582, %585 : vector<1x8xf32>
    %c29_267 = arith.constant 29 : index
    %587 = memref.load %arg2[%c29_267] : memref<32xf32, #tpu.memory_space<smem>>
    %588 = vector.broadcast %587 : f32 to vector<1x8xf32>
    %589 = arith.addf %586, %588 : vector<1x8xf32>
    %cst_268 = arith.constant 0.000000e+00 : f32
    %590 = vector.broadcast %cst_268 : f32 to vector<1x8xf32>
    %591 = arith.maximumf %589, %590 : vector<1x8xf32>
    %c0_269 = arith.constant 0 : index
    %c29_270 = arith.constant 29 : index
    %592 = memref.load %arg3[%c0_269, %c29_270] : memref<2x32xf32, #tpu.memory_space<smem>>
    %593 = vector.broadcast %592 : f32 to vector<1x8xf32>
    %594 = arith.mulf %593, %591 : vector<1x8xf32>
    %595 = arith.addf %575, %594 : vector<1x8xf32>
    %c1_271 = arith.constant 1 : index
    %c29_272 = arith.constant 29 : index
    %596 = memref.load %arg3[%c1_271, %c29_272] : memref<2x32xf32, #tpu.memory_space<smem>>
    %597 = vector.broadcast %596 : f32 to vector<1x8xf32>
    %598 = arith.mulf %597, %591 : vector<1x8xf32>
    %599 = arith.addf %579, %598 : vector<1x8xf32>
    %c0_273 = arith.constant 0 : index
    %c30 = arith.constant 30 : index
    %600 = memref.load %arg1[%c0_273, %c30] : memref<2x32xf32, #tpu.memory_space<smem>>
    %601 = vector.broadcast %600 : f32 to vector<1x8xf32>
    %602 = arith.mulf %601, %0 : vector<1x8xf32>
    %c1_274 = arith.constant 1 : index
    %c30_275 = arith.constant 30 : index
    %603 = memref.load %arg1[%c1_274, %c30_275] : memref<2x32xf32, #tpu.memory_space<smem>>
    %604 = vector.broadcast %603 : f32 to vector<1x8xf32>
    %605 = arith.mulf %604, %1 : vector<1x8xf32>
    %606 = arith.addf %602, %605 : vector<1x8xf32>
    %c30_276 = arith.constant 30 : index
    %607 = memref.load %arg2[%c30_276] : memref<32xf32, #tpu.memory_space<smem>>
    %608 = vector.broadcast %607 : f32 to vector<1x8xf32>
    %609 = arith.addf %606, %608 : vector<1x8xf32>
    %cst_277 = arith.constant 0.000000e+00 : f32
    %610 = vector.broadcast %cst_277 : f32 to vector<1x8xf32>
    %611 = arith.maximumf %609, %610 : vector<1x8xf32>
    %c0_278 = arith.constant 0 : index
    %c30_279 = arith.constant 30 : index
    %612 = memref.load %arg3[%c0_278, %c30_279] : memref<2x32xf32, #tpu.memory_space<smem>>
    %613 = vector.broadcast %612 : f32 to vector<1x8xf32>
    %614 = arith.mulf %613, %611 : vector<1x8xf32>
    %615 = arith.addf %595, %614 : vector<1x8xf32>
    %c1_280 = arith.constant 1 : index
    %c30_281 = arith.constant 30 : index
    %616 = memref.load %arg3[%c1_280, %c30_281] : memref<2x32xf32, #tpu.memory_space<smem>>
    %617 = vector.broadcast %616 : f32 to vector<1x8xf32>
    %618 = arith.mulf %617, %611 : vector<1x8xf32>
    %619 = arith.addf %599, %618 : vector<1x8xf32>
    %c0_282 = arith.constant 0 : index
    %c31 = arith.constant 31 : index
    %620 = memref.load %arg1[%c0_282, %c31] : memref<2x32xf32, #tpu.memory_space<smem>>
    %621 = vector.broadcast %620 : f32 to vector<1x8xf32>
    %622 = arith.mulf %621, %0 : vector<1x8xf32>
    %c1_283 = arith.constant 1 : index
    %c31_284 = arith.constant 31 : index
    %623 = memref.load %arg1[%c1_283, %c31_284] : memref<2x32xf32, #tpu.memory_space<smem>>
    %624 = vector.broadcast %623 : f32 to vector<1x8xf32>
    %625 = arith.mulf %624, %1 : vector<1x8xf32>
    %626 = arith.addf %622, %625 : vector<1x8xf32>
    %c31_285 = arith.constant 31 : index
    %627 = memref.load %arg2[%c31_285] : memref<32xf32, #tpu.memory_space<smem>>
    %628 = vector.broadcast %627 : f32 to vector<1x8xf32>
    %629 = arith.addf %626, %628 : vector<1x8xf32>
    %cst_286 = arith.constant 0.000000e+00 : f32
    %630 = vector.broadcast %cst_286 : f32 to vector<1x8xf32>
    %631 = arith.maximumf %629, %630 : vector<1x8xf32>
    %c0_287 = arith.constant 0 : index
    %c31_288 = arith.constant 31 : index
    %632 = memref.load %arg3[%c0_287, %c31_288] : memref<2x32xf32, #tpu.memory_space<smem>>
    %633 = vector.broadcast %632 : f32 to vector<1x8xf32>
    %634 = arith.mulf %633, %631 : vector<1x8xf32>
    %635 = arith.addf %615, %634 : vector<1x8xf32>
    %c1_289 = arith.constant 1 : index
    %c31_290 = arith.constant 31 : index
    %636 = memref.load %arg3[%c1_289, %c31_290] : memref<2x32xf32, #tpu.memory_space<smem>>
    %637 = vector.broadcast %636 : f32 to vector<1x8xf32>
    %638 = arith.mulf %637, %631 : vector<1x8xf32>
    %639 = arith.addf %619, %638 : vector<1x8xf32>
    %c0_291 = arith.constant 0 : index
    %640 = memref.load %arg4[%c0_291] : memref<2xf32, #tpu.memory_space<smem>>
    %641 = vector.broadcast %640 : f32 to vector<1x8xf32>
    %642 = arith.addf %635, %641 : vector<1x8xf32>
    %cst_292 = arith.constant 0.000000e+00 : f32
    %643 = vector.broadcast %cst_292 : f32 to vector<1x8xf32>
    %644 = arith.maximumf %642, %643 : vector<1x8xf32>
    %c0_293 = arith.constant 0 : index
    %c0_294 = arith.constant 0 : index
    %645 = vector.load %arg5[%c0_293, %c0_294] : memref<2x8xf32, #tpu.memory_space<vmem>>, vector<1x8xf32>
    tpu.vector_store %arg5[%c0_293, %c0_294], %644 {strides = array<i32>} : memref<2x8xf32, #tpu.memory_space<vmem>>, vector<1x8xf32>,
    %c1_295 = arith.constant 1 : index
    %646 = memref.load %arg4[%c1_295] : memref<2xf32, #tpu.memory_space<smem>>
    %647 = vector.broadcast %646 : f32 to vector<1x8xf32>
    %648 = arith.addf %639, %647 : vector<1x8xf32>
    %cst_296 = arith.constant 0.000000e+00 : f32
    %649 = vector.broadcast %cst_296 : f32 to vector<1x8xf32>
    %650 = arith.maximumf %648, %649 : vector<1x8xf32>
    %c1_297 = arith.constant 1 : index
    %c0_298 = arith.constant 0 : index
    %651 = vector.load %arg5[%c1_297, %c0_298] : memref<2x8xf32, #tpu.memory_space<vmem>>, vector<1x8xf32>
    tpu.vector_store %arg5[%c1_297, %c0_298], %650 {strides = array<i32>} : memref<2x8xf32, #tpu.memory_space<vmem>>, vector<1x8xf32>,
    return
  }
}

</mosaic_0001>

<llo_original>
// kernel: tpu_custom_call.1
$region0: #{tpu_custom_call.1}
  #allocation0 [shape = 'u32[]', space=smem, size = 0x4, offset = 0x4, fixed_abs, tag = 'smem constant byte address 0x4 - core index']
  #allocation1 [shape = 'u32[144,128]{1,0:T(1,128)}', space=vmem, size = 0x12000, scoped, tag = 'internal scratch']
  %s0 = inlined_call_operand.hbm [shape: f32[2,8], index: 0, kind: input, shape index: {}]
  %s1 = inlined_call_operand.vmem [shape: f32[2,32], index: 1, kind: input, shape index: {}]
  %s2 = inlined_call_operand.vmem [shape: f32[32], index: 2, kind: input, shape index: {}]
  %s3 = inlined_call_operand.vmem [shape: f32[2,32], index: 3, kind: input, shape index: {}]
  %s4 = inlined_call_operand.vmem [shape: f32[2], index: 4, kind: input, shape index: {}]
  %s5 = inlined_call_operand.hbm [shape: f32[2,8], index: 5, kind: output, shape index: {}]
  %s6 = sld [smem:[#allocation0]]
  $region50: #{tpu_custom_call.1} parent=0
    _
  %s8 = ssub.s32 1, %s6
  %s9 = scalar_select 0, %s8, %s6
  $region1: #{tpu_custom_call.1} parent=0
    #allocation2 [shape = 'u8[1024]{0}', space=vmem, size = 0x400, scoped, tag = 'input window, operand 0, single buffered']
    #allocation3 [shape = 's32[1]{0}', space=sflag, size = 0x4, scoped, tag = 'scoped memory for tpu_custom_call.1']
    #allocation4 [shape = 's32[1]{0}', space=sflag, size = 0x4, scoped, tag = 'scoped memory for tpu_custom_call.1']
    #allocation5 [shape = 's32[1]{0}', space=sflag, size = 0x4, scoped, tag = 'scoped memory for tpu_custom_call.1']
    #allocation6 [shape = 'u8[1024]{0}', space=smem, size = 0x400, scoped, tag = 'input window, operand 1, single buffered']
    #allocation7 [shape = 'u8[512]{0}', space=smem, size = 0x200, scoped, tag = 'input window, operand 2, single buffered']
    #allocation8 [shape = 's32[1]{0}', space=sflag, size = 0x4, scoped, tag = 'scoped memory for tpu_custom_call.1']
    #allocation9 [shape = 'u8[1024]{0}', space=smem, size = 0x400, scoped, tag = 'input window, operand 3, single buffered']
    #allocation10 [shape = 'u8[512]{0}', space=smem, size = 0x200, scoped, tag = 'input window, operand 4, single buffered']
    #allocation11 [shape = 's32[1]{0}', space=sflag, size = 0x4, scoped, tag = 'scoped memory for tpu_custom_call.1']
    #allocation12 [shape = 'u8[1024]{0}', space=vmem, size = 0x400, scoped, tag = 'output window, operand 0, single buffered']
    %10 = vsyncpa [#allocation3], 0
    %11 = vsyncpa [#allocation5], 0
    %12 = vsyncpa [#allocation8], 0
    %13 = vsyncpa [#allocation11], 0
    %14 = vsyncpa [#allocation4], 0
    // Predicated region
    $region2: #{tpu_custom_call.1} parent=1 // pred_check
      _
    $region3: #{tpu_custom_call.1} parent=1 // pred_check_branch
      %16 = sbr.rel (0) target = $region5
    $region4: #{tpu_custom_call.1} parent=1 // pred_region
      %s18 = ssub.s32 32, 32
      %19 = vsyncadd [#allocation3], %s18
      %s21 = sshll.u32 [#allocation2], 4
      %s22 = int_to_ptr.vmem [resolvable:$true] %s21
      %24 = dma.hbm_to_vmem [thread:$0]  %s0, 32, %s22, [#allocation3]
    $region5: #{tpu_custom_call.1} parent=1 // pred_fallthru
      _
    // Predicated region
    $region6: #{tpu_custom_call.1} parent=1 // pred_check
      _
    $region7: #{tpu_custom_call.1} parent=1 // pred_check_branch
      %26 = sbr.rel (0) target = $region9
    $region8: #{tpu_custom_call.1} parent=1 // pred_region
      %s28 = ssub.s32 32, 32
      %29 = vsyncadd [#allocation5], %s28
      %s31 = sshll.u32 %s1, 4
      %s32 = int_to_ptr.vmem [resolvable:$true] %s31
      %34 = dma.vmem_to_smem %s32, 32, [#allocation6], [#allocation5]
    $region9: #{tpu_custom_call.1} parent=1 // pred_fallthru
      _
    // Predicated region
    $region10: #{tpu_custom_call.1} parent=1 // pred_check
      _
    $region11: #{tpu_custom_call.1} parent=1 // pred_check_branch
      %36 = sbr.rel (0) target = $region13
    $region12: #{tpu_custom_call.1} parent=1 // pred_region
      %s38 = ssub.s32 16, 16
      %39 = vsyncadd [#allocation8], %s38
      %s41 = sshll.u32 %s2, 4
      %s42 = int_to_ptr.vmem [resolvable:$true] %s41
      %44 = dma.vmem_to_smem %s42, 16, [#allocation7], [#allocation8]
    $region13: #{tpu_custom_call.1} parent=1 // pred_fallthru
      _
    // Predicated region
    $region14: #{tpu_custom_call.1} parent=1 // pred_check
      _
    $region15: #{tpu_custom_call.1} parent=1 // pred_check_branch
      %46 = sbr.rel (0) target = $region17
    $region16: #{tpu_custom_call.1} parent=1 // pred_region
      %s48 = ssub.s32 32, 32
      %49 = vsyncadd [#allocation8], %s48
      %s51 = sshll.u32 %s3, 4
      %s52 = int_to_ptr.vmem [resolvable:$true] %s51
      %54 = dma.vmem_to_smem %s52, 32, [#allocation9], [#allocation8]
    $region17: #{tpu_custom_call.1} parent=1 // pred_fallthru
      _
    // Predicated region
    $region18: #{tpu_custom_call.1} parent=1 // pred_check
      _
    $region19: #{tpu_custom_call.1} parent=1 // pred_check_branch
      %56 = sbr.rel (0) target = $region21
    $region20: #{tpu_custom_call.1} parent=1 // pred_region
      %s58 = ssub.s32 16, 16
      %59 = vsyncadd [#allocation11], %s58
      %s61 = sshll.u32 %s4, 4
      %s62 = int_to_ptr.vmem [resolvable:$true] %s61
      %64 = dma.vmem_to_smem %s62, 16, [#allocation10], [#allocation11]
    $region21: #{tpu_custom_call.1} parent=1 // pred_fallthru
      _
    // Predicated region
    $region22: #{tpu_custom_call.1} parent=1 // pred_check
      _
    $region23: #{tpu_custom_call.1} parent=1 // pred_check_branch
      %66 = sbr.rel (0) target = $region25
    $region24: #{tpu_custom_call.1} parent=1 // pred_region
      %67 = dma.done [#allocation3], 32
    $region25: #{tpu_custom_call.1} parent=1 // pred_fallthru
      _
    // Predicated region
    $region26: #{tpu_custom_call.1} parent=1 // pred_check
      _
    $region27: #{tpu_custom_call.1} parent=1 // pred_check_branch
      %69 = sbr.rel (0) target = $region29
    $region28: #{tpu_custom_call.1} parent=1 // pred_region
      %70 = dma.done [#allocation5], 32
    $region29: #{tpu_custom_call.1} parent=1 // pred_fallthru
      _
    // Predicated region
    $region30: #{tpu_custom_call.1} parent=1 // pred_check
      _
    $region31: #{tpu_custom_call.1} parent=1 // pred_check_branch
      %72 = sbr.rel (0) target = $region33
    $region32: #{tpu_custom_call.1} parent=1 // pred_region
      %73 = dma.done [#allocation8], 16
    $region33: #{tpu_custom_call.1} parent=1 // pred_fallthru
      _
    // Predicated region
    $region34: #{tpu_custom_call.1} parent=1 // pred_check
      _
    $region35: #{tpu_custom_call.1} parent=1 // pred_check_branch
      %75 = sbr.rel (0) target = $region37
    $region36: #{tpu_custom_call.1} parent=1 // pred_region
      %76 = dma.done [#allocation8], 32
    $region37: #{tpu_custom_call.1} parent=1 // pred_fallthru
      _
    // Predicated region
    $region38: #{tpu_custom_call.1} parent=1 // pred_check
      _
    $region39: #{tpu_custom_call.1} parent=1 // pred_check_branch
      %78 = sbr.rel (0) target = $region41
    $region40: #{tpu_custom_call.1} parent=1 // pred_region
      %79 = dma.done [#allocation11], 16
    $region41: #{tpu_custom_call.1} parent=1 // pred_fallthru
      _
    %80 = sfence
    %v81 = vld [vmem:[#allocation2] sm:$0x1]
    %v82 = vld [vmem:[#allocation2 + $0x1] sm:$0x1]
    %s83 = sld [smem:[#allocation6]]
    %v84 = vstv %s83
    %v85 = vmul.f32 %v84, %v81
    %s86 = sld [smem:[#allocation6 + $0x80]]
    %v87 = vstv %s86
    %v88 = vmul.f32 %v87, %v82
    %v89 = vadd.f32 %v85, %v88
    %s90 = sld [smem:[#allocation7]]
    %v91 = vstv %s90
    %v92 = vadd.f32 %v89, %v91
    %v93 = vmax.f32 %v92, 0.0
    %s94 = sld [smem:[#allocation9]]
    %v95 = vstv %s94
    %v96 = vmul.f32 %v95, %v93
    %s97 = sld [smem:[#allocation9 + $0x80]]
    %v98 = vstv %s97
    %v99 = vmul.f32 %v98, %v93
    %s100 = sld [smem:[#allocation6 + $0x1]]
    %v101 = vstv %s100
    %v102 = vmul.f32 %v101, %v81
    %s103 = sld [smem:[#allocation6 + $0x81]]
    %v104 = vstv %s103
    %v105 = vmul.f32 %v104, %v82
    %v106 = vadd.f32 %v102, %v105
    %s107 = sld [smem:[#allocation7 + $0x1]]
    %v108 = vstv %s107
    %v109 = vadd.f32 %v106, %v108
    %v110 = vmax.f32 %v109, 0.0
    %s111 = sld [smem:[#allocation9 + $0x1]]
    %v112 = vstv %s111
    %v113 = vmul.f32 %v112, %v110
    %v114 = vadd.f32 %v96, %v113
    %s115 = sld [smem:[#allocation9 + $0x81]]
    %v116 = vstv %s115
    %v117 = vmul.f32 %v116, %v110
    %v118 = vadd.f32 %v99, %v117
    %s119 = sld [smem:[#allocation6 + $0x2]]
    %v120 = vstv %s119
    %v121 = vmul.f32 %v120, %v81
    %s122 = sld [smem:[#allocation6 + $0x82]]
    %v123 = vstv %s122
    %v124 = vmul.f32 %v123, %v82
    %v125 = vadd.f32 %v121, %v124
    %s126 = sld [smem:[#allocation7 + $0x2]]
    %v127 = vstv %s126
    %v128 = vadd.f32 %v125, %v127
    %v129 = vmax.f32 %v128, 0.0
    %s130 = sld [smem:[#allocation9 + $0x2]]
    %v131 = vstv %s130
    %v132 = vmul.f32 %v131, %v129
    %v133 = vadd.f32 %v114, %v132
    %s134 = sld [smem:[#allocation9 + $0x82]]
    %v135 = vstv %s134
    %v136 = vmul.f32 %v135, %v129
    %v137 = vadd.f32 %v118, %v136
    %s138 = sld [smem:[#allocation6 + $0x3]]
    %v139 = vstv %s138
    %v140 = vmul.f32 %v139, %v81
    %s141 = sld [smem:[#allocation6 + $0x83]]
    %v142 = vstv %s141
    %v143 = vmul.f32 %v142, %v82
    %v144 = vadd.f32 %v140, %v143
    %s145 = sld [smem:[#allocation7 + $0x3]]
    %v146 = vstv %s145
    %v147 = vadd.f32 %v144, %v146
    %v148 = vmax.f32 %v147, 0.0
    %s149 = sld [smem:[#allocation9 + $0x3]]
    %v150 = vstv %s149
    %v151 = vmul.f32 %v150, %v148
    %v152 = vadd.f32 %v133, %v151
    %s153 = sld [smem:[#allocation9 + $0x83]]
    %v154 = vstv %s153
    %v155 = vmul.f32 %v154, %v148
    %v156 = vadd.f32 %v137, %v155
    %s157 = sld [smem:[#allocation6 + $0x4]]
    %v158 = vstv %s157
    %v159 = vmul.f32 %v158, %v81
    %s160 = sld [smem:[#allocation6 + $0x84]]
    %v161 = vstv %s160
    %v162 = vmul.f32 %v161, %v82
    %v163 = vadd.f32 %v159, %v162
    %s164 = sld [smem:[#allocation7 + $0x4]]
    %v165 = vstv %s164
    %v166 = vadd.f32 %v163, %v165
    %v167 = vmax.f32 %v166, 0.0
    %s168 = sld [smem:[#allocation9 + $0x4]]
    %v169 = vstv %s168
    %v170 = vmul.f32 %v169, %v167
    %v171 = vadd.f32 %v152, %v170
    %s172 = sld [smem:[#allocation9 + $0x84]]
    %v173 = vstv %s172
    %v174 = vmul.f32 %v173, %v167
    %v175 = vadd.f32 %v156, %v174
    %s176 = sld [smem:[#allocation6 + $0x5]]
    %v177 = vstv %s176
    %v178 = vmul.f32 %v177, %v81
    %s179 = sld [smem:[#allocation6 + $0x85]]
    %v180 = vstv %s179
    %v181 = vmul.f32 %v180, %v82
    %v182 = vadd.f32 %v178, %v181
    %s183 = sld [smem:[#allocation7 + $0x5]]
    %v184 = vstv %s183
    %v185 = vadd.f32 %v182, %v184
    %v186 = vmax.f32 %v185, 0.0
    %s187 = sld [smem:[#allocation9 + $0x5]]
    %v188 = vstv %s187
    %v189 = vmul.f32 %v188, %v186
    %v190 = vadd.f32 %v171, %v189
    %s191 = sld [smem:[#allocation9 + $0x85]]
    %v192 = vstv %s191
    %v193 = vmul.f32 %v192, %v186
    %v194 = vadd.f32 %v175, %v193
    %s195 = sld [smem:[#allocation6 + $0x6]]
    %v196 = vstv %s195
    %v197 = vmul.f32 %v196, %v81
    %s198 = sld [smem:[#allocation6 + $0x86]]
    %v199 = vstv %s198
    %v200 = vmul.f32 %v199, %v82
    %v201 = vadd.f32 %v197, %v200
    %s202 = sld [smem:[#allocation7 + $0x6]]
    %v203 = vstv %s202
    %v204 = vadd.f32 %v201, %v203
    %v205 = vmax.f32 %v204, 0.0
    %s206 = sld [smem:[#allocation9 + $0x6]]
    %v207 = vstv %s206
    %v208 = vmul.f32 %v207, %v205
    %v209 = vadd.f32 %v190, %v208
    %s210 = sld [smem:[#allocation9 + $0x86]]
    %v211 = vstv %s210
    %v212 = vmul.f32 %v211, %v205
    %v213 = vadd.f32 %v194, %v212
    %s214 = sld [smem:[#allocation6 + $0x7]]
    %v215 = vstv %s214
    %v216 = vmul.f32 %v215, %v81
    %s217 = sld [smem:[#allocation6 + $0x87]]
    %v218 = vstv %s217
    %v219 = vmul.f32 %v218, %v82
    %v220 = vadd.f32 %v216, %v219
    %s221 = sld [smem:[#allocation7 + $0x7]]
    %v222 = vstv %s221
    %v223 = vadd.f32 %v220, %v222
    %v224 = vmax.f32 %v223, 0.0
    %s225 = sld [smem:[#allocation9 + $0x7]]
    %v226 = vstv %s225
    %v227 = vmul.f32 %v226, %v224
    %v228 = vadd.f32 %v209, %v227
    %s229 = sld [smem:[#allocation9 + $0x87]]
    %v230 = vstv %s229
    %v231 = vmul.f32 %v230, %v224
    %v232 = vadd.f32 %v213, %v231
    %s233 = sld [smem:[#allocation6 + $0x8]]
    %v234 = vstv %s233
    %v235 = vmul.f32 %v234, %v81
    %s236 = sld [smem:[#allocation6 + $0x88]]
    %v237 = vstv %s236
    %v238 = vmul.f32 %v237, %v82
    %v239 = vadd.f32 %v235, %v238
    %s240 = sld [smem:[#allocation7 + $0x8]]
    %v241 = vstv %s240
    %v242 = vadd.f32 %v239, %v241
    %v243 = vmax.f32 %v242, 0.0
    %s244 = sld [smem:[#allocation9 + $0x8]]
    %v245 = vstv %s244
    %v246 = vmul.f32 %v245, %v243
    %v247 = vadd.f32 %v228, %v246
    %s248 = sld [smem:[#allocation9 + $0x88]]
    %v249 = vstv %s248
    %v250 = vmul.f32 %v249, %v243
    %v251 = vadd.f32 %v232, %v250
    %s252 = sld [smem:[#allocation6 + $0x9]]
    %v253 = vstv %s252
    %v254 = vmul.f32 %v253, %v81
    %s255 = sld [smem:[#allocation6 + $0x89]]
    %v256 = vstv %s255
    %v257 = vmul.f32 %v256, %v82
    %v258 = vadd.f32 %v254, %v257
    %s259 = sld [smem:[#allocation7 + $0x9]]
    %v260 = vstv %s259
    %v261 = vadd.f32 %v258, %v260
    %v262 = vmax.f32 %v261, 0.0
    %s263 = sld [smem:[#allocation9 + $0x9]]
    %v264 = vstv %s263
    %v265 = vmul.f32 %v264, %v262
    %v266 = vadd.f32 %v247, %v265
    %s267 = sld [smem:[#allocation9 + $0x89]]
    %v268 = vstv %s267
    %v269 = vmul.f32 %v268, %v262
    %v270 = vadd.f32 %v251, %v269
    %s271 = sld [smem:[#allocation6 + $0xa]]
    %v272 = vstv %s271
    %v273 = vmul.f32 %v272, %v81
    %s274 = sld [smem:[#allocation6 + $0x8a]]
    %v275 = vstv %s274
    %v276 = vmul.f32 %v275, %v82
    %v277 = vadd.f32 %v273, %v276
    %s278 = sld [smem:[#allocation7 + $0xa]]
    %v279 = vstv %s278
    %v280 = vadd.f32 %v277, %v279
    %v281 = vmax.f32 %v280, 0.0
    %s282 = sld [smem:[#allocation9 + $0xa]]
    %v283 = vstv %s282
    %v284 = vmul.f32 %v283, %v281
    %v285 = vadd.f32 %v266, %v284
    %s286 = sld [smem:[#allocation9 + $0x8a]]
    %v287 = vstv %s286
    %v288 = vmul.f32 %v287, %v281
    %v289 = vadd.f32 %v270, %v288
    %s290 = sld [smem:[#allocation6 + $0xb]]
    %v291 = vstv %s290
    %v292 = vmul.f32 %v291, %v81
    %s293 = sld [smem:[#allocation6 + $0x8b]]
    %v294 = vstv %s293
    %v295 = vmul.f32 %v294, %v82
    %v296 = vadd.f32 %v292, %v295
    %s297 = sld [smem:[#allocation7 + $0xb]]
    %v298 = vstv %s297
    %v299 = vadd.f32 %v296, %v298
    %v300 = vmax.f32 %v299, 0.0
    %s301 = sld [smem:[#allocation9 + $0xb]]
    %v302 = vstv %s301
    %v303 = vmul.f32 %v302, %v300
    %v304 = vadd.f32 %v285, %v303
    %s305 = sld [smem:[#allocation9 + $0x8b]]
    %v306 = vstv %s305
    %v307 = vmul.f32 %v306, %v300
    %v308 = vadd.f32 %v289, %v307
    %s309 = sld [smem:[#allocation6 + $0xc]]
    %v310 = vstv %s309
    %v311 = vmul.f32 %v310, %v81
    %s312 = sld [smem:[#allocation6 + $0x8c]]
    %v313 = vstv %s312
    %v314 = vmul.f32 %v313, %v82
    %v315 = vadd.f32 %v311, %v314
    %s316 = sld [smem:[#allocation7 + $0xc]]
    %v317 = vstv %s316
    %v318 = vadd.f32 %v315, %v317
    %v319 = vmax.f32 %v318, 0.0
    %s320 = sld [smem:[#allocation9 + $0xc]]
    %v321 = vstv %s320
    %v322 = vmul.f32 %v321, %v319
    %v323 = vadd.f32 %v304, %v322
    %s324 = sld [smem:[#allocation9 + $0x8c]]
    %v325 = vstv %s324
    %v326 = vmul.f32 %v325, %v319
    %v327 = vadd.f32 %v308, %v326
    %s328 = sld [smem:[#allocation6 + $0xd]]
    %v329 = vstv %s328
    %v330 = vmul.f32 %v329, %v81
    %s331 = sld [smem:[#allocation6 + $0x8d]]
    %v332 = vstv %s331
    %v333 = vmul.f32 %v332, %v82
    %v334 = vadd.f32 %v330, %v333
    %s335 = sld [smem:[#allocation7 + $0xd]]
    %v336 = vstv %s335
    %v337 = vadd.f32 %v334, %v336
    %v338 = vmax.f32 %v337, 0.0
    %s339 = sld [smem:[#allocation9 + $0xd]]
    %v340 = vstv %s339
    %v341 = vmul.f32 %v340, %v338
    %v342 = vadd.f32 %v323, %v341
    %s343 = sld [smem:[#allocation9 + $0x8d]]
    %v344 = vstv %s343
    %v345 = vmul.f32 %v344, %v338
    %v346 = vadd.f32 %v327, %v345
    %s347 = sld [smem:[#allocation6 + $0xe]]
    %v348 = vstv %s347
    %v349 = vmul.f32 %v348, %v81
    %s350 = sld [smem:[#allocation6 + $0x8e]]
    %v351 = vstv %s350
    %v352 = vmul.f32 %v351, %v82
    %v353 = vadd.f32 %v349, %v352
    %s354 = sld [smem:[#allocation7 + $0xe]]
    %v355 = vstv %s354
    %v356 = vadd.f32 %v353, %v355
    %v357 = vmax.f32 %v356, 0.0
    %s358 = sld [smem:[#allocation9 + $0xe]]
    %v359 = vstv %s358
    %v360 = vmul.f32 %v359, %v357
    %v361 = vadd.f32 %v342, %v360
    %s362 = sld [smem:[#allocation9 + $0x8e]]
    %v363 = vstv %s362
    %v364 = vmul.f32 %v363, %v357
    %v365 = vadd.f32 %v346, %v364
    %s366 = sld [smem:[#allocation6 + $0xf]]
    %v367 = vstv %s366
    %v368 = vmul.f32 %v367, %v81
    %s369 = sld [smem:[#allocation6 + $0x8f]]
    %v370 = vstv %s369
    %v371 = vmul.f32 %v370, %v82
    %v372 = vadd.f32 %v368, %v371
    %s373 = sld [smem:[#allocation7 + $0xf]]
    %v374 = vstv %s373
    %v375 = vadd.f32 %v372, %v374
    %v376 = vmax.f32 %v375, 0.0
    %s377 = sld [smem:[#allocation9 + $0xf]]
    %v378 = vstv %s377
    %v379 = vmul.f32 %v378, %v376
    %v380 = vadd.f32 %v361, %v379
    %s381 = sld [smem:[#allocation9 + $0x8f]]
    %v382 = vstv %s381
    %v383 = vmul.f32 %v382, %v376
    %v384 = vadd.f32 %v365, %v383
    %s385 = sld [smem:[#allocation6 + $0x10]]
    %v386 = vstv %s385
    %v387 = vmul.f32 %v386, %v81
    %s388 = sld [smem:[#allocation6 + $0x90]]
    %v389 = vstv %s388
    %v390 = vmul.f32 %v389, %v82
    %v391 = vadd.f32 %v387, %v390
    %s392 = sld [smem:[#allocation7 + $0x10]]
    %v393 = vstv %s392
    %v394 = vadd.f32 %v391, %v393
    %v395 = vmax.f32 %v394, 0.0
    %s396 = sld [smem:[#allocation9 + $0x10]]
    %v397 = vstv %s396
    %v398 = vmul.f32 %v397, %v395
    %v399 = vadd.f32 %v380, %v398
    %s400 = sld [smem:[#allocation9 + $0x90]]
    %v401 = vstv %s400
    %v402 = vmul.f32 %v401, %v395
    %v403 = vadd.f32 %v384, %v402
    %s404 = sld [smem:[#allocation6 + $0x11]]
    %v405 = vstv %s404
    %v406 = vmul.f32 %v405, %v81
    %s407 = sld [smem:[#allocation6 + $0x91]]
    %v408 = vstv %s407
    %v409 = vmul.f32 %v408, %v82
    %v410 = vadd.f32 %v406, %v409
    %s411 = sld [smem:[#allocation7 + $0x11]]
    %v412 = vstv %s411
    %v413 = vadd.f32 %v410, %v412
    %v414 = vmax.f32 %v413, 0.0
    %s415 = sld [smem:[#allocation9 + $0x11]]
    %v416 = vstv %s415
    %v417 = vmul.f32 %v416, %v414
    %v418 = vadd.f32 %v399, %v417
    %s419 = sld [smem:[#allocation9 + $0x91]]
    %v420 = vstv %s419
    %v421 = vmul.f32 %v420, %v414
    %v422 = vadd.f32 %v403, %v421
    %s423 = sld [smem:[#allocation6 + $0x12]]
    %v424 = vstv %s423
    %v425 = vmul.f32 %v424, %v81
    %s426 = sld [smem:[#allocation6 + $0x92]]
    %v427 = vstv %s426
    %v428 = vmul.f32 %v427, %v82
    %v429 = vadd.f32 %v425, %v428
    %s430 = sld [smem:[#allocation7 + $0x12]]
    %v431 = vstv %s430
    %v432 = vadd.f32 %v429, %v431
    %v433 = vmax.f32 %v432, 0.0
    %s434 = sld [smem:[#allocation9 + $0x12]]
    %v435 = vstv %s434
    %v436 = vmul.f32 %v435, %v433
    %v437 = vadd.f32 %v418, %v436
    %s438 = sld [smem:[#allocation9 + $0x92]]
    %v439 = vstv %s438
    %v440 = vmul.f32 %v439, %v433
    %v441 = vadd.f32 %v422, %v440
    %s442 = sld [smem:[#allocation6 + $0x13]]
    %v443 = vstv %s442
    %v444 = vmul.f32 %v443, %v81
    %s445 = sld [smem:[#allocation6 + $0x93]]
    %v446 = vstv %s445
    %v447 = vmul.f32 %v446, %v82
    %v448 = vadd.f32 %v444, %v447
    %s449 = sld [smem:[#allocation7 + $0x13]]
    %v450 = vstv %s449
    %v451 = vadd.f32 %v448, %v450
    %v452 = vmax.f32 %v451, 0.0
    %s453 = sld [smem:[#allocation9 + $0x13]]
    %v454 = vstv %s453
    %v455 = vmul.f32 %v454, %v452
    %v456 = vadd.f32 %v437, %v455
    %s457 = sld [smem:[#allocation9 + $0x93]]
    %v458 = vstv %s457
    %v459 = vmul.f32 %v458, %v452
    %v460 = vadd.f32 %v441, %v459
    %s461 = sld [smem:[#allocation6 + $0x14]]
    %v462 = vstv %s461
    %v463 = vmul.f32 %v462, %v81
    %s464 = sld [smem:[#allocation6 + $0x94]]
    %v465 = vstv %s464
    %v466 = vmul.f32 %v465, %v82
    %v467 = vadd.f32 %v463, %v466
    %s468 = sld [smem:[#allocation7 + $0x14]]
    %v469 = vstv %s468
    %v470 = vadd.f32 %v467, %v469
    %v471 = vmax.f32 %v470, 0.0
    %s472 = sld [smem:[#allocation9 + $0x14]]
    %v473 = vstv %s472
    %v474 = vmul.f32 %v473, %v471
    %v475 = vadd.f32 %v456, %v474
    %s476 = sld [smem:[#allocation9 + $0x94]]
    %v477 = vstv %s476
    %v478 = vmul.f32 %v477, %v471
    %v479 = vadd.f32 %v460, %v478
    %s480 = sld [smem:[#allocation6 + $0x15]]
    %v481 = vstv %s480
    %v482 = vmul.f32 %v481, %v81
    %s483 = sld [smem:[#allocation6 + $0x95]]
    %v484 = vstv %s483
    %v485 = vmul.f32 %v484, %v82
    %v486 = vadd.f32 %v482, %v485
    %s487 = sld [smem:[#allocation7 + $0x15]]
    %v488 = vstv %s487
    %v489 = vadd.f32 %v486, %v488
    %v490 = vmax.f32 %v489, 0.0
    %s491 = sld [smem:[#allocation9 + $0x15]]
    %v492 = vstv %s491
    %v493 = vmul.f32 %v492, %v490
    %v494 = vadd.f32 %v475, %v493
    %s495 = sld [smem:[#allocation9 + $0x95]]
    %v496 = vstv %s495
    %v497 = vmul.f32 %v496, %v490
    %v498 = vadd.f32 %v479, %v497
    %s499 = sld [smem:[#allocation6 + $0x16]]
    %v500 = vstv %s499
    %v501 = vmul.f32 %v500, %v81
    %s502 = sld [smem:[#allocation6 + $0x96]]
    %v503 = vstv %s502
    %v504 = vmul.f32 %v503, %v82
    %v505 = vadd.f32 %v501, %v504
    %s506 = sld [smem:[#allocation7 + $0x16]]
    %v507 = vstv %s506
    %v508 = vadd.f32 %v505, %v507
    %v509 = vmax.f32 %v508, 0.0
    %s510 = sld [smem:[#allocation9 + $0x16]]
    %v511 = vstv %s510
    %v512 = vmul.f32 %v511, %v509
    %v513 = vadd.f32 %v494, %v512
    %s514 = sld [smem:[#allocation9 + $0x96]]
    %v515 = vstv %s514
    %v516 = vmul.f32 %v515, %v509
    %v517 = vadd.f32 %v498, %v516
    %s518 = sld [smem:[#allocation6 + $0x17]]
    %v519 = vstv %s518
    %v520 = vmul.f32 %v519, %v81
    %s521 = sld [smem:[#allocation6 + $0x97]]
    %v522 = vstv %s521
    %v523 = vmul.f32 %v522, %v82
    %v524 = vadd.f32 %v520, %v523
    %s525 = sld [smem:[#allocation7 + $0x17]]
    %v526 = vstv %s525
    %v527 = vadd.f32 %v524, %v526
    %v528 = vmax.f32 %v527, 0.0
    %s529 = sld [smem:[#allocation9 + $0x17]]
    %v530 = vstv %s529
    %v531 = vmul.f32 %v530, %v528
    %v532 = vadd.f32 %v513, %v531
    %s533 = sld [smem:[#allocation9 + $0x97]]
    %v534 = vstv %s533
    %v535 = vmul.f32 %v534, %v528
    %v536 = vadd.f32 %v517, %v535
    %s537 = sld [smem:[#allocation6 + $0x18]]
    %v538 = vstv %s537
    %v539 = vmul.f32 %v538, %v81
    %s540 = sld [smem:[#allocation6 + $0x98]]
    %v541 = vstv %s540
    %v542 = vmul.f32 %v541, %v82
    %v543 = vadd.f32 %v539, %v542
    %s544 = sld [smem:[#allocation7 + $0x18]]
    %v545 = vstv %s544
    %v546 = vadd.f32 %v543, %v545
    %v547 = vmax.f32 %v546, 0.0
    %s548 = sld [smem:[#allocation9 + $0x18]]
    %v549 = vstv %s548
    %v550 = vmul.f32 %v549, %v547
    %v551 = vadd.f32 %v532, %v550
    %s552 = sld [smem:[#allocation9 + $0x98]]
    %v553 = vstv %s552
    %v554 = vmul.f32 %v553, %v547
    %v555 = vadd.f32 %v536, %v554
    %s556 = sld [smem:[#allocation6 + $0x19]]
    %v557 = vstv %s556
    %v558 = vmul.f32 %v557, %v81
    %s559 = sld [smem:[#allocation6 + $0x99]]
    %v560 = vstv %s559
    %v561 = vmul.f32 %v560, %v82
    %v562 = vadd.f32 %v558, %v561
    %s563 = sld [smem:[#allocation7 + $0x19]]
    %v564 = vstv %s563
    %v565 = vadd.f32 %v562, %v564
    %v566 = vmax.f32 %v565, 0.0
    %s567 = sld [smem:[#allocation9 + $0x19]]
    %v568 = vstv %s567
    %v569 = vmul.f32 %v568, %v566
    %v570 = vadd.f32 %v551, %v569
    %s571 = sld [smem:[#allocation9 + $0x99]]
    %v572 = vstv %s571
    %v573 = vmul.f32 %v572, %v566
    %v574 = vadd.f32 %v555, %v573
    %s575 = sld [smem:[#allocation6 + $0x1a]]
    %v576 = vstv %s575
    %v577 = vmul.f32 %v576, %v81
    %s578 = sld [smem:[#allocation6 + $0x9a]]
    %v579 = vstv %s578
    %v580 = vmul.f32 %v579, %v82
    %v581 = vadd.f32 %v577, %v580
    %s582 = sld [smem:[#allocation7 + $0x1a]]
    %v583 = vstv %s582
    %v584 = vadd.f32 %v581, %v583
    %v585 = vmax.f32 %v584, 0.0
    %s586 = sld [smem:[#allocation9 + $0x1a]]
    %v587 = vstv %s586
    %v588 = vmul.f32 %v587, %v585
    %v589 = vadd.f32 %v570, %v588
    %s590 = sld [smem:[#allocation9 + $0x9a]]
    %v591 = vstv %s590
    %v592 = vmul.f32 %v591, %v585
    %v593 = vadd.f32 %v574, %v592
    %s594 = sld [smem:[#allocation6 + $0x1b]]
    %v595 = vstv %s594
    %v596 = vmul.f32 %v595, %v81
    %s597 = sld [smem:[#allocation6 + $0x9b]]
    %v598 = vstv %s597
    %v599 = vmul.f32 %v598, %v82
    %v600 = vadd.f32 %v596, %v599
    %s601 = sld [smem:[#allocation7 + $0x1b]]
    %v602 = vstv %s601
    %v603 = vadd.f32 %v600, %v602
    %v604 = vmax.f32 %v603, 0.0
    %s605 = sld [smem:[#allocation9 + $0x1b]]
    %v606 = vstv %s605
    %v607 = vmul.f32 %v606, %v604
    %v608 = vadd.f32 %v589, %v607
    %s609 = sld [smem:[#allocation9 + $0x9b]]
    %v610 = vstv %s609
    %v611 = vmul.f32 %v610, %v604
    %v612 = vadd.f32 %v593, %v611
    %s613 = sld [smem:[#allocation6 + $0x1c]]
    %v614 = vstv %s613
    %v615 = vmul.f32 %v614, %v81
    %s616 = sld [smem:[#allocation6 + $0x9c]]
    %v617 = vstv %s616
    %v618 = vmul.f32 %v617, %v82
    %v619 = vadd.f32 %v615, %v618
    %s620 = sld [smem:[#allocation7 + $0x1c]]
    %v621 = vstv %s620
    %v622 = vadd.f32 %v619, %v621
    %v623 = vmax.f32 %v622, 0.0
    %s624 = sld [smem:[#allocation9 + $0x1c]]
    %v625 = vstv %s624
    %v626 = vmul.f32 %v625, %v623
    %v627 = vadd.f32 %v608, %v626
    %s628 = sld [smem:[#allocation9 + $0x9c]]
    %v629 = vstv %s628
    %v630 = vmul.f32 %v629, %v623
    %v631 = vadd.f32 %v612, %v630
    %s632 = sld [smem:[#allocation6 + $0x1d]]
    %v633 = vstv %s632
    %v634 = vmul.f32 %v633, %v81
    %s635 = sld [smem:[#allocation6 + $0x9d]]
    %v636 = vstv %s635
    %v637 = vmul.f32 %v636, %v82
    %v638 = vadd.f32 %v634, %v637
    %s639 = sld [smem:[#allocation7 + $0x1d]]
    %v640 = vstv %s639
    %v641 = vadd.f32 %v638, %v640
    %v642 = vmax.f32 %v641, 0.0
    %s643 = sld [smem:[#allocation9 + $0x1d]]
    %v644 = vstv %s643
    %v645 = vmul.f32 %v644, %v642
    %v646 = vadd.f32 %v627, %v645
    %s647 = sld [smem:[#allocation9 + $0x9d]]
    %v648 = vstv %s647
    %v649 = vmul.f32 %v648, %v642
    %v650 = vadd.f32 %v631, %v649
    %s651 = sld [smem:[#allocation6 + $0x1e]]
    %v652 = vstv %s651
    %v653 = vmul.f32 %v652, %v81
    %s654 = sld [smem:[#allocation6 + $0x9e]]
    %v655 = vstv %s654
    %v656 = vmul.f32 %v655, %v82
    %v657 = vadd.f32 %v653, %v656
    %s658 = sld [smem:[#allocation7 + $0x1e]]
    %v659 = vstv %s658
    %v660 = vadd.f32 %v657, %v659
    %v661 = vmax.f32 %v660, 0.0
    %s662 = sld [smem:[#allocation9 + $0x1e]]
    %v663 = vstv %s662
    %v664 = vmul.f32 %v663, %v661
    %v665 = vadd.f32 %v646, %v664
    %s666 = sld [smem:[#allocation9 + $0x9e]]
    %v667 = vstv %s666
    %v668 = vmul.f32 %v667, %v661
    %v669 = vadd.f32 %v650, %v668
    %s670 = sld [smem:[#allocation6 + $0x1f]]
    %v671 = vstv %s670
    %v672 = vmul.f32 %v671, %v81
    %s673 = sld [smem:[#allocation6 + $0x9f]]
    %v674 = vstv %s673
    %v675 = vmul.f32 %v674, %v82
    %v676 = vadd.f32 %v672, %v675
    %s677 = sld [smem:[#allocation7 + $0x1f]]
    %v678 = vstv %s677
    %v679 = vadd.f32 %v676, %v678
    %v680 = vmax.f32 %v679, 0.0
    %s681 = sld [smem:[#allocation9 + $0x1f]]
    %v682 = vstv %s681
    %v683 = vmul.f32 %v682, %v680
    %v684 = vadd.f32 %v665, %v683
    %s685 = sld [smem:[#allocation9 + $0x9f]]
    %v686 = vstv %s685
    %v687 = vmul.f32 %v686, %v680
    %v688 = vadd.f32 %v669, %v687
    %s689 = sld [smem:[#allocation10]]
    %v690 = vstv %s689
    %v691 = vadd.f32 %v684, %v690
    %v692 = vmax.f32 %v691, 0.0
    %vm693 = vcmask 57344
    %694 = vst.msk [vmem:[#allocation12] sm:$0x1] %vm693, %v692
    %s695 = sld [smem:[#allocation10 + $0x1]]
    %v696 = vstv %s695
    %v697 = vadd.f32 %v688, %v696
    %v698 = vmax.f32 %v697, 0.0
    %699 = vst.msk [vmem:[#allocation12 + $0x1] sm:$0x1] %vm693, %v698
    // Predicated region
    $region42: #{tpu_custom_call.1} parent=1 // pred_check
      _
    $region43: #{tpu_custom_call.1} parent=1 // pred_check_branch
      %701 = sbr.rel (0) target = $region45
    $region44: #{tpu_custom_call.1} parent=1 // pred_region
      %s703 = ssub.s32 32, 32
      %704 = vsyncadd [#allocation4], %s703
      %s706 = sshll.u32 [#allocation12], 4
      %s707 = int_to_ptr.vmem [resolvable:$true] %s706
      %709 = dma.vmem_to_hbm [thread:$0]  %s707, 32, %s5, [#allocation4]
    $region45: #{tpu_custom_call.1} parent=1 // pred_fallthru
      _
    // Predicated region
    $region46: #{tpu_custom_call.1} parent=1 // pred_check
      _
    $region47: #{tpu_custom_call.1} parent=1 // pred_check_branch
      %711 = sbr.rel (0) target = $region49
    $region48: #{tpu_custom_call.1} parent=1 // pred_region
      %712 = dma.done [#allocation4], 32
    $region49: #{tpu_custom_call.1} parent=1 // pred_fallthru
      _
    %713 = vsyncpa [#allocation3], 1
    %714 = vsyncpa [#allocation4], 1
    %715 = vsyncpa [#allocation5], 1
    %716 = vsyncpa [#allocation8], 1
    %717 = vsyncpa [#allocation11], 1

</llo_original>
